<compile_context>
chip_gen: v7x
topology: tpu7x:2x2x1
jax: 0.10.0
libtpu: 0.0.40
codegen_flags: <defaults>
</compile_context>

<pallas_src>
import functools
import math

import jax
import jax.numpy as jnp
from jax.experimental import pallas as pl
from jax.experimental.pallas import tpu as pltpu


def _round_up(x, m):
    return (x + m - 1) // m * m


TILE_B_MAX = 512  # review: 256 left the kernel per-step-overhead bound.


# ----------------------------------------------------------------------------
# Pallas kernel: full MLP hot path, 4 matmuls + relus + lane-dense softmax.
# ----------------------------------------------------------------------------
def _actor_critic_kernel(action_dim,
                         state_ref, w1op, b1, w2, b2, w3, b3, wfin, bfin,
                         out_ref):
    f32 = jnp.float32
    bf16 = jnp.bfloat16
    H = b1.shape[-1]

    s = state_ref[...]                                         # bf16 [TB, S_pad]

    # Single MXU pass over the state: columns [0:H] = fc1, [H:] = fc5a option term.
    so = jnp.dot(s, w1op[...], preferred_element_type=f32)     # [TB, H + 128]
    opt_term = so[:, H:]                                       # [TB, 128]
    x = jnp.maximum(so[:, :H] + b1[...], 0.0)                  # fc1 + relu   [TB, H]

    x = jnp.maximum(
        jnp.dot(x.astype(bf16), w2[...], preferred_element_type=f32) + b2[...],
        0.0)                                                   # fc2 + relu   [TB, H]
    y = jnp.maximum(
        jnp.dot(x.astype(bf16), w3[...], preferred_element_type=f32) + b3[...],
        0.0)                                                   # fc3a|fc3b    [TB, 2H]

    # Fused head: lanes [0:A] = logits (fc4a folded into fc5a + option term),
    # lane A = critic value (fc4b), remaining lanes 0.
    fin = (jnp.dot(y.astype(bf16), wfin[...], preferred_element_type=f32)
           + opt_term + bfin[...])                             # [TB, 128]

    lane = jax.lax.broadcasted_iota(jnp.int32, fin.shape, 1)
    is_logit = lane < action_dim

    masked = jnp.where(is_logit, fin, -1e30)                   # exclude value/pad lanes
    m = jnp.max(masked, axis=-1, keepdims=True)
    e = jnp.exp(masked - m)                                    # pad/value lanes -> 0
    denom = jnp.sum(e, axis=-1, keepdims=True)
    # TODO(synk): switch to an exact divide if these probs feed log_prob/entropy.
    probs = e * pl.reciprocal(denom, approx=True)

    packed = jnp.where(is_logit, probs,
                       jnp.where(lane == action_dim, fin, 0.0))
    out_ref[...] = packed.astype(out_ref.dtype)                # single dense bf16 store


# ----------------------------------------------------------------------------
# Raw parameter init (PyTorch-Linear-style, matches the nn.Module layout).
# ----------------------------------------------------------------------------
def init_params(state_dim, action_dim, hidden=256, seed=42):
    info_dim = state_dim - 4 * action_dim + 3 * action_dim     # = state_dim - action_dim
    key = jax.random.PRNGKey(seed)

    def linear(k, fan_in, fan_out):
        kw, kb = jax.random.split(k)
        bound = 1.0 / math.sqrt(fan_in)
        w = jax.random.uniform(kw, (fan_in, fan_out), jnp.float32, -bound, bound)
        b = jax.random.uniform(kb, (1, fan_out), jnp.float32, -bound, bound)
        return w, b

    ks = jax.random.split(key, 7)
    w1, b1 = linear(ks[0], info_dim, hidden)
    w2, b2 = linear(ks[1], hidden, hidden)
    w3a, b3a = linear(ks[2], hidden, hidden)
    w3b, b3b = linear(ks[3], hidden, hidden)
    w4a, b4a = linear(ks[4], hidden, hidden)
    w4b, b4b = linear(ks[5], hidden, 1)
    w5, b5 = linear(ks[6], hidden + action_dim, action_dim)
    return dict(w1=w1, b1=b1, w2=w2, b2=b2, w3a=w3a, b3a=b3a, w3b=w3b, b3b=b3b,
                w4a=w4a, b4a=b4a, w4b=w4b, b4b=b4b, w5=w5, b5=b5)


# ----------------------------------------------------------------------------
# Fold / fuse / pad raw params into the kernel-ready form (exact rewrites).
# ----------------------------------------------------------------------------
def prepare_kernel_params(raw, state_dim, action_dim):
    H = raw["w2"].shape[0]
    L = action_dim
    S = state_dim
    assert raw["w1"].shape[0] == S - L, \
        "fc1 in_features must equal state_dim - action_dim (state layout mismatch)"

    out_w = max(128, _round_up(L + 1, 128))
    S_pad = _round_up(S, 128)
    bf16 = jnp.bfloat16

    # fc1 over the raw state: play_options rows [3L:4L] unused -> zero rows.
    w1_exp = jnp.zeros((S, H), jnp.float32)
    w1_exp = w1_exp.at[:3 * L].set(raw["w1"][:3 * L])
    w1_exp = w1_exp.at[4 * L:].set(raw["w1"][3 * L:])

    # fc5a split: ax part vs play_options part.
    w5_ax = raw["w5"][:H]                                      # [H, L]
    w5_opt = raw["w5"][H:]                                     # [L, L]
    w5op_exp = jnp.zeros((S, out_w), jnp.float32)
    w5op_exp = w5op_exp.at[3 * L:4 * L, :L].set(w5_opt)        # play_options -> logits

    # Fuse both state-consuming matmuls into one [S_pad, H + out_w] slab
    # (zero padding rows for the lane-padded state columns -> exact).
    w1op = jnp.zeros((S_pad, H + out_w), jnp.float32)
    w1op = w1op.at[:S, :H].set(w1_exp)
    w1op = w1op.at[:S, H:].set(w5op_exp)

    # fused fc3a | fc3b.
    w3 = jnp.concatenate([raw["w3a"], raw["w3b"]], axis=1)     # [H, 2H]
    b3 = jnp.concatenate([raw["b3a"], raw["b3b"]], axis=1)     # [1, 2H]

    # fold fc4a into fc5a (no activation in between -> exact).
    W45 = raw["w4a"] @ w5_ax                                   # [H, L]
    b45 = raw["b4a"] @ w5_ax + raw["b5"]                       # [1, L]

    # fused final head: lanes [0:L] = logits, lane L = value.
    wfin = jnp.zeros((2 * H, out_w), jnp.float32)
    wfin = wfin.at[:H, :L].set(W45)                            # ax branch -> logits
    wfin = wfin.at[H:, L].set(raw["w4b"][:, 0])                # bx branch -> value
    bfin = jnp.zeros((1, out_w), jnp.float32)
    bfin = bfin.at[0, :L].set(b45[0])
    bfin = bfin.at[0, L].set(raw["b4b"][0, 0])

    return dict(
        w1op=w1op.astype(bf16), b1=raw["b1"],
        w2=raw["w2"].astype(bf16), b2=raw["b2"],
        w3=w3.astype(bf16), b3=b3,
        wfin=wfin.astype(bf16), bfin=bfin,
    )


# ----------------------------------------------------------------------------
# Wrapper: batch-gridded pallas_call, weights resident across grid steps.
# ----------------------------------------------------------------------------
def actor_critic_forward(state, kparams, action_dim):
    """state: [B, state_dim] f32.  Returns (actor_probs [B, action_dim] f32,
    state_value [B, 1] f32) -- same semantics as the PyTorch non-multi forward
    applied per row."""
    B, S = state.shape
    A = action_dim
    out_w = kparams["bfin"].shape[1]
    S_pad = kparams["w1op"].shape[0]

    # Batch tiling (bf16 input -> 16-row alignment):
    #   - tiny batches: a single 16-row tile.
    #   - otherwise: at least 2 grid steps (feeds both v7x TensorCores; neutral
    #     on single-TC v5e/v6e), capped at TILE_B_MAX rows per step.
    if B <= 16:
        tile_b = 16
    else:
        tile_b = min(TILE_B_MAX, _round_up(pl.cdiv(B, 2), 16))
    b_pad = _round_up(B, tile_b)
    grid = (b_pad // tile_b,)

    # Pre-cast + lane-pad the state in the wrapper (half the input DMA, clean tiles).
    st = jnp.pad(state, ((0, b_pad - B), (0, S_pad - S))).astype(jnp.bfloat16)

    def resident_spec(arr):
        nd = arr.ndim
        return pl.BlockSpec(arr.shape, lambda i, _nd=nd: (0,) * _nd)

    order = ["w1op", "b1", "w2", "b2", "w3", "b3", "wfin", "bfin"]
    weights = [kparams[k] for k in order]

    in_specs = [pl.BlockSpec((tile_b, S_pad), lambda i: (i, 0))] + \
               [resident_spec(w) for w in weights]

    out = pl.pallas_call(
        functools.partial(_actor_critic_kernel, A),
        out_shape=jax.ShapeDtypeStruct((b_pad, out_w), jnp.bfloat16),
        grid=grid,
        in_specs=in_specs,
        out_specs=pl.BlockSpec((tile_b, out_w), lambda i: (i, 0)),
        compiler_params=pltpu.CompilerParams(
            dimension_semantics=("parallel",)),
    )(st, *weights)

    return (out[:B, :A].astype(jnp.float32),
            out[:B, A:A + 1].astype(jnp.float32))


# ----------------------------------------------------------------------------
# Pure-JAX f32 reference (exact PyTorch-module math) for verification.
# ----------------------------------------------------------------------------
def reference_forward(state, raw, action_dim):
    L = action_dim
    info = jnp.concatenate([state[:, :3 * L], state[:, 4 * L:]], axis=1)
    opts = state[:, 3 * L:4 * L]
    relu = lambda v: jnp.maximum(v, 0.0)
    x = relu(info @ raw["w1"] + raw["b1"])
    x = relu(x @ raw["w2"] + raw["b2"])
    ax = relu(x @ raw["w3a"] + raw["b3a"])
    bx = relu(x @ raw["w3b"] + raw["b3b"])
    ax = ax @ raw["w4a"] + raw["b4a"]
    bx = bx @ raw["w4b"] + raw["b4b"]
    logits = jnp.concatenate([ax, opts], axis=1) @ raw["w5"] + raw["b5"]
    return jax.nn.softmax(logits, axis=-1), bx


if __name__ == "__main__":
    # Small shapes consistent with the module (hidden is fixed at 256 by __init__).
    action_dim = 8
    state_dim = 60                      # info_dim = state_dim - action_dim = 52

    raw = init_params(state_dim, action_dim)
    kparams = prepare_kernel_params(raw, state_dim, action_dim)

    key = jax.random.PRNGKey(0)
    # Two batch sizes: single-tile inference path and the multi-tile (grid=2) path.
    for batch in (8, 300):
        key, sub = jax.random.split(key)
        state = jax.random.uniform(sub, (batch, state_dim), jnp.float32)

        actor, value = actor_critic_forward(state, kparams, action_dim)
        actor = jax.block_until_ready(actor)
        value = jax.block_until_ready(value)

        ref_actor, ref_value = reference_forward(state, raw, action_dim)

        assert actor.shape == (batch, action_dim)
        assert value.shape == (batch, 1)
        # bf16 MXU + bf16 output slab + fc4a folding => relaxed tolerances vs f32 ref.
        assert jnp.allclose(actor, ref_actor, atol=2e-2), "actor mismatch vs f32 reference"
        assert jnp.allclose(value, ref_value, atol=3e-2), "value mismatch vs f32 reference"
        assert jnp.allclose(jnp.sum(actor, axis=-1), jnp.ones((batch,)), atol=3e-2)

    print("KERNEL_OK")
</pallas_src>

<mosaic_0001>
module attributes {stable_mosaic.version = 11 : i64} {
  func.func @_actor_critic_kernel(%arg0: i32, %arg1: memref<16x128xbf16, #tpu.memory_space<vmem>>, %arg2: memref<128x384xbf16, #tpu.memory_space<vmem>>, %arg3: memref<1x256xf32, #tpu.memory_space<vmem>>, %arg4: memref<256x256xbf16, #tpu.memory_space<vmem>>, %arg5: memref<1x256xf32, #tpu.memory_space<vmem>>, %arg6: memref<256x512xbf16, #tpu.memory_space<vmem>>, %arg7: memref<1x512xf32, #tpu.memory_space<vmem>>, %arg8: memref<512x128xbf16, #tpu.memory_space<vmem>>, %arg9: memref<1x128xf32, #tpu.memory_space<vmem>>, %arg10: memref<16x128xbf16, #tpu.memory_space<vmem>>) attributes {dimension_semantics = [#tpu.dimension_semantics<parallel>], iteration_bounds = array<i64: 1>, scalar_prefetch = 0 : i64, scratch_operands = 0 : i64, tpu.core_type = #tpu.core_type<tc>, window_params = [{transform_indices = @transform_0, window_bounds = array<i64: 16, 128>}, {pipeline_mode = #tpu.pipeline_mode<synchronous>, transform_indices = @transform_1, window_bounds = array<i64: 128, 384>}, {pipeline_mode = #tpu.pipeline_mode<synchronous>, transform_indices = @transform_2, window_bounds = array<i64: 1, 256>}, {pipeline_mode = #tpu.pipeline_mode<synchronous>, transform_indices = @transform_3, window_bounds = array<i64: 256, 256>}, {pipeline_mode = #tpu.pipeline_mode<synchronous>, transform_indices = @transform_4, window_bounds = array<i64: 1, 256>}, {pipeline_mode = #tpu.pipeline_mode<synchronous>, transform_indices = @transform_5, window_bounds = array<i64: 256, 512>}, {pipeline_mode = #tpu.pipeline_mode<synchronous>, transform_indices = @transform_6, window_bounds = array<i64: 1, 512>}, {pipeline_mode = #tpu.pipeline_mode<synchronous>, transform_indices = @transform_7, window_bounds = array<i64: 512, 128>}, {pipeline_mode = #tpu.pipeline_mode<synchronous>, transform_indices = @transform_8, window_bounds = array<i64: 1, 128>}, {transform_indices = @transform_9, window_bounds = array<i64: 16, 128>}]} {
    %c0 = arith.constant 0 : index
    %c0_0 = arith.constant 0 : index
    %0 = vector.load %arg1[%c0, %c0_0] : memref<16x128xbf16, #tpu.memory_space<vmem>>, vector<16x128xbf16>
    %c0_1 = arith.constant 0 : index
    %c0_2 = arith.constant 0 : index
    %1 = vector.load %arg2[%c0_1, %c0_2] : memref<128x384xbf16, #tpu.memory_space<vmem>>, vector<128x384xbf16>
    %cst = arith.constant dense<0.000000e+00> : vector<16x384xf32>
    %2 = tpu.matmul %0, %1, %cst {dimension_numbers = #tpu.dot_dimension_numbers<[1], [0], [0], [1], [0, 0, 1, 1], [], []>} : vector<16x128xbf16>, vector<128x384xbf16>, vector<16x384xf32> -> vector<16x384xf32>
    %3 = vector.extract_strided_slice %2 {offsets = [0, 256], sizes = [16, 128], strides = [1, 1]} : vector<16x384xf32> to vector<16x128xf32>
    %4 = vector.extract_strided_slice %2 {offsets = [0, 0], sizes = [16, 256], strides = [1, 1]} : vector<16x384xf32> to vector<16x256xf32>
    %c0_3 = arith.constant 0 : index
    %c0_4 = arith.constant 0 : index
    %5 = vector.load %arg3[%c0_3, %c0_4] : memref<1x256xf32, #tpu.memory_space<vmem>>, vector<1x256xf32>
    %6 = vector.broadcast %5 : vector<1x256xf32> to vector<16x256xf32>
    %7 = arith.addf %4, %6 : vector<16x256xf32>
    %cst_5 = arith.constant 0.000000e+00 : f32
    %8 = vector.broadcast %cst_5 : f32 to vector<16x256xf32>
    %9 = arith.maximumf %7, %8 : vector<16x256xf32>
    %10 = arith.truncf %9 : vector<16x256xf32> to vector<16x256xbf16>
    %c0_6 = arith.constant 0 : index
    %c0_7 = arith.constant 0 : index
    %11 = vector.load %arg4[%c0_6, %c0_7] : memref<256x256xbf16, #tpu.memory_space<vmem>>, vector<256x256xbf16>
    %cst_8 = arith.constant dense<0.000000e+00> : vector<16x256xf32>
    %12 = tpu.matmul %10, %11, %cst_8 {dimension_numbers = #tpu.dot_dimension_numbers<[1], [0], [0], [1], [0, 0, 1, 1], [], []>} : vector<16x256xbf16>, vector<256x256xbf16>, vector<16x256xf32> -> vector<16x256xf32>
    %c0_9 = arith.constant 0 : index
    %c0_10 = arith.constant 0 : index
    %13 = vector.load %arg5[%c0_9, %c0_10] : memref<1x256xf32, #tpu.memory_space<vmem>>, vector<1x256xf32>
    %14 = vector.broadcast %13 : vector<1x256xf32> to vector<16x256xf32>
    %15 = arith.addf %12, %14 : vector<16x256xf32>
    %cst_11 = arith.constant 0.000000e+00 : f32
    %16 = vector.broadcast %cst_11 : f32 to vector<16x256xf32>
    %17 = arith.maximumf %15, %16 : vector<16x256xf32>
    %18 = arith.truncf %17 : vector<16x256xf32> to vector<16x256xbf16>
    %c0_12 = arith.constant 0 : index
    %c0_13 = arith.constant 0 : index
    %19 = vector.load %arg6[%c0_12, %c0_13] : memref<256x512xbf16, #tpu.memory_space<vmem>>, vector<256x512xbf16>
    %cst_14 = arith.constant dense<0.000000e+00> : vector<16x512xf32>
    %20 = tpu.matmul %18, %19, %cst_14 {dimension_numbers = #tpu.dot_dimension_numbers<[1], [0], [0], [1], [0, 0, 1, 1], [], []>} : vector<16x256xbf16>, vector<256x512xbf16>, vector<16x512xf32> -> vector<16x512xf32>
    %c0_15 = arith.constant 0 : index
    %c0_16 = arith.constant 0 : index
    %21 = vector.load %arg7[%c0_15, %c0_16] : memref<1x512xf32, #tpu.memory_space<vmem>>, vector<1x512xf32>
    %22 = vector.broadcast %21 : vector<1x512xf32> to vector<16x512xf32>
    %23 = arith.addf %20, %22 : vector<16x512xf32>
    %cst_17 = arith.constant 0.000000e+00 : f32
    %24 = vector.broadcast %cst_17 : f32 to vector<16x512xf32>
    %25 = arith.maximumf %23, %24 : vector<16x512xf32>
    %26 = arith.truncf %25 : vector<16x512xf32> to vector<16x512xbf16>
    %c0_18 = arith.constant 0 : index
    %c0_19 = arith.constant 0 : index
    %27 = vector.load %arg8[%c0_18, %c0_19] : memref<512x128xbf16, #tpu.memory_space<vmem>>, vector<512x128xbf16>
    %cst_20 = arith.constant dense<0.000000e+00> : vector<16x128xf32>
    %28 = tpu.matmul %26, %27, %cst_20 {dimension_numbers = #tpu.dot_dimension_numbers<[1], [0], [0], [1], [0, 0, 1, 1], [], []>} : vector<16x512xbf16>, vector<512x128xbf16>, vector<16x128xf32> -> vector<16x128xf32>
    %29 = arith.addf %28, %3 : vector<16x128xf32>
    %c0_21 = arith.constant 0 : index
    %c0_22 = arith.constant 0 : index
    %30 = vector.load %arg9[%c0_21, %c0_22] : memref<1x128xf32, #tpu.memory_space<vmem>>, vector<1x128xf32>
    %31 = vector.broadcast %30 : vector<1x128xf32> to vector<16x128xf32>
    %32 = arith.addf %29, %31 : vector<16x128xf32>
    %33 = tpu.iota {dimensions = array<i32: 1>} : vector<16x128xi32>
    %c8_i32 = arith.constant 8 : i32
    %34 = vector.broadcast %c8_i32 : i32 to vector<16x128xi32>
    %35 = arith.cmpi slt, %33, %34 : vector<16x128xi32>
    %cst_23 = arith.constant -1.000000e+30 : f32
    %36 = vector.broadcast %cst_23 : f32 to vector<16x128xf32>
    %37 = arith.select %35, %32, %36 : vector<16x128xi1>, vector<16x128xf32>
    %cst_24 = arith.constant dense<0xFF800000> : vector<16xf32>
    %38 = vector.multi_reduction <maximumf>, %37, %cst_24 [1] : vector<16x128xf32> to vector<16xf32>
    %39 = vector.shape_cast %38 : vector<16xf32> to vector<16x1xf32>
    %40 = vector.broadcast %39 : vector<16x1xf32> to vector<16x128xf32>
    %41 = arith.subf %37, %40 : vector<16x128xf32>
    %42 = math.exp %41 : vector<16x128xf32>
    %cst_25 = arith.constant dense<0.000000e+00> : vector<16xf32>
    %43 = vector.multi_reduction <add>, %42, %cst_25 [1] : vector<16x128xf32> to vector<16xf32>
    %44 = vector.shape_cast %43 : vector<16xf32> to vector<16x1xf32>
    %45 = tpu.reciprocal %44 {approx = true} : vector<16x1xf32> -> vector<16x1xf32>
    %46 = vector.broadcast %45 : vector<16x1xf32> to vector<16x128xf32>
    %47 = arith.mulf %42, %46 : vector<16x128xf32>
    %c8_i32_26 = arith.constant 8 : i32
    %48 = vector.broadcast %c8_i32_26 : i32 to vector<16x128xi32>
    %49 = arith.cmpi eq, %33, %48 : vector<16x128xi32>
    %cst_27 = arith.constant 0.000000e+00 : f32
    %50 = vector.broadcast %cst_27 : f32 to vector<16x128xf32>
    %51 = arith.select %49, %32, %50 : vector<16x128xi1>, vector<16x128xf32>
    %52 = arith.select %35, %47, %51 : vector<16x128xi1>, vector<16x128xf32>
    %53 = arith.truncf %52 : vector<16x128xf32> to vector<16x128xbf16>
    %c0_28 = arith.constant 0 : index
    %c0_29 = arith.constant 0 : index
    %54 = vector.load %arg10[%c0_28, %c0_29] : memref<16x128xbf16, #tpu.memory_space<vmem>>, vector<16x128xbf16>
    tpu.vector_store %arg10[%c0_28, %c0_29], %53 {strides = array<i32>} : memref<16x128xbf16, #tpu.memory_space<vmem>>, vector<16x128xbf16>,
    return
  }
  func.func @transform_0(%arg0: i32) -> (i32, i32) {
    %c0_i32 = arith.constant 0 : i32
    %c0_i32_0 = arith.constant 0 : i32
    return %arg0, %c0_i32 : i32, i32
  }
  func.func @transform_1(%arg0: i32) -> (i32, i32) {
    %c0_i32 = arith.constant 0 : i32
    %c0_i32_0 = arith.constant 0 : i32
    %c0_i32_1 = arith.constant 0 : i32
    return %c0_i32, %c0_i32_0 : i32, i32
  }
  func.func @transform_2(%arg0: i32) -> (i32, i32) {
    %c0_i32 = arith.constant 0 : i32
    %c0_i32_0 = arith.constant 0 : i32
    %c0_i32_1 = arith.constant 0 : i32
    return %c0_i32, %c0_i32_0 : i32, i32
  }
  func.func @transform_3(%arg0: i32) -> (i32, i32) {
    %c0_i32 = arith.constant 0 : i32
    %c0_i32_0 = arith.constant 0 : i32
    %c0_i32_1 = arith.constant 0 : i32
    return %c0_i32, %c0_i32_0 : i32, i32
  }
  func.func @transform_4(%arg0: i32) -> (i32, i32) {
    %c0_i32 = arith.constant 0 : i32
    %c0_i32_0 = arith.constant 0 : i32
    %c0_i32_1 = arith.constant 0 : i32
    return %c0_i32, %c0_i32_0 : i32, i32
  }
  func.func @transform_5(%arg0: i32) -> (i32, i32) {
    %c0_i32 = arith.constant 0 : i32
    %c0_i32_0 = arith.constant 0 : i32
    %c0_i32_1 = arith.constant 0 : i32
    return %c0_i32, %c0_i32_0 : i32, i32
  }
  func.func @transform_6(%arg0: i32) -> (i32, i32) {
    %c0_i32 = arith.constant 0 : i32
    %c0_i32_0 = arith.constant 0 : i32
    %c0_i32_1 = arith.constant 0 : i32
    return %c0_i32, %c0_i32_0 : i32, i32
  }
  func.func @transform_7(%arg0: i32) -> (i32, i32) {
    %c0_i32 = arith.constant 0 : i32
    %c0_i32_0 = arith.constant 0 : i32
    %c0_i32_1 = arith.constant 0 : i32
    return %c0_i32, %c0_i32_0 : i32, i32
  }
  func.func @transform_8(%arg0: i32) -> (i32, i32) {
    %c0_i32 = arith.constant 0 : i32
    %c0_i32_0 = arith.constant 0 : i32
    %c0_i32_1 = arith.constant 0 : i32
    return %c0_i32, %c0_i32_0 : i32, i32
  }
  func.func @transform_9(%arg0: i32) -> (i32, i32) {
    %c0_i32 = arith.constant 0 : i32
    %c0_i32_0 = arith.constant 0 : i32
    return %arg0, %c0_i32 : i32, i32
  }
}

</mosaic_0001>

<llo_original>
// kernel: tpu_custom_call.1
$region0: #{tpu_custom_call.1}
  #allocation0 [shape = 'u32[]', space=smem, size = 0x4, offset = 0x4, fixed_abs, tag = 'smem constant byte address 0x4 - core index']
  #allocation1 [shape = 'u32[144,128]{1,0:T(1,128)}', space=vmem, size = 0x12000, scoped, tag = 'internal scratch']
  %s0 = inlined_call_operand.hbm [shape: bf16[16,128], index: 0, kind: input, shape index: {}]
  %s1 = inlined_call_operand.hbm [shape: bf16[128,384], index: 1, kind: input, shape index: {}]
  %s2 = inlined_call_operand.vmem [shape: f32[1,256], index: 2, kind: input, shape index: {}]
  %s3 = inlined_call_operand.hbm [shape: bf16[256,256], index: 3, kind: input, shape index: {}]
  %s4 = inlined_call_operand.vmem [shape: f32[1,256], index: 4, kind: input, shape index: {}]
  %s5 = inlined_call_operand.hbm [shape: bf16[256,512], index: 5, kind: input, shape index: {}]
  %s6 = inlined_call_operand.vmem [shape: f32[1,512], index: 6, kind: input, shape index: {}]
  %s7 = inlined_call_operand.hbm [shape: bf16[512,128], index: 7, kind: input, shape index: {}]
  %s8 = inlined_call_operand.vmem [shape: f32[1,128], index: 8, kind: input, shape index: {}]
  %s9 = inlined_call_operand.hbm [shape: bf16[16,128], index: 9, kind: output, shape index: {}]
  %s10 = sld [smem:[#allocation0]]
  $region66: #{tpu_custom_call.1} parent=0
    _
  %s12 = ssub.s32 1, %s10
  %s13 = scalar_select 0, %s12, %s10
  $region1: #{tpu_custom_call.1} parent=0
    #allocation2 [shape = 'u8[4096]{0}', space=vmem, size = 0x1000, scoped, tag = 'input window, operand 0, single buffered']
    #allocation3 [shape = 's32[1]{0}', space=sflag, size = 0x4, scoped, tag = 'scoped memory for tpu_custom_call.1']
    #allocation4 [shape = 's32[1]{0}', space=sflag, size = 0x4, scoped, tag = 'scoped memory for tpu_custom_call.1']
    #allocation5 [shape = 'u8[98304]{0}', space=vmem, size = 0x18000, scoped, tag = 'input window, operand 1, single buffered']
    #allocation6 [shape = 's32[1]{0}', space=sflag, size = 0x4, scoped, tag = 'scoped memory for tpu_custom_call.1']
    #allocation7 [shape = 'u8[131072]{0}', space=vmem, size = 0x20000, scoped, tag = 'input window, operand 3, single buffered']
    #allocation8 [shape = 'u8[262144]{0}', space=vmem, size = 0x40000, scoped, tag = 'input window, operand 5, single buffered']
    #allocation9 [shape = 's32[1]{0}', space=sflag, size = 0x4, scoped, tag = 'scoped memory for tpu_custom_call.1']
    #allocation10 [shape = 'u8[131072]{0}', space=vmem, size = 0x20000, scoped, tag = 'input window, operand 7, single buffered']
    #allocation11 [shape = 'u8[4096]{0}', space=vmem, size = 0x1000, scoped, tag = 'output window, operand 0, single buffered']
    %14 = vsyncpa [#allocation3], 0
    %15 = vsyncpa [#allocation6], 0
    %16 = vsyncpa [#allocation9], 0
    %17 = vsyncpa [#allocation4], 0
    // Predicated region
    $region2: #{tpu_custom_call.1} parent=1 // pred_check
      _
    $region3: #{tpu_custom_call.1} parent=1 // pred_check_branch
      %19 = sbr.rel (0) target = $region5
    $region4: #{tpu_custom_call.1} parent=1 // pred_region
      %s21 = ssub.s32 128, 128
      %22 = vsyncadd [#allocation3], %s21
      %s23 = sshll.u32 [#allocation2], 4
      %s24 = int_to_ptr.vmem [resolvable:$true] %s23
      %29 = dma.hbm_to_vmem [thread:$0]  %s0, 128, %s24, [#allocation3], 64, 64, 4
    $region5: #{tpu_custom_call.1} parent=1 // pred_fallthru
      _
    // Predicated region
    $region6: #{tpu_custom_call.1} parent=1 // pred_check
      _
    $region7: #{tpu_custom_call.1} parent=1 // pred_check_branch
      %31 = sbr.rel (0) target = $region9
    $region8: #{tpu_custom_call.1} parent=1 // pred_region
      %s33 = ssub.s32 3072, 3072
      %34 = vsyncadd [#allocation6], %s33
      %s35 = sshll.u32 [#allocation5], 4
      %s36 = int_to_ptr.vmem [resolvable:$true] %s35
      %41 = dma.hbm_to_vmem [thread:$0]  %s1, 3072, %s36, [#allocation6], 192, 192, 12
    $region9: #{tpu_custom_call.1} parent=1 // pred_fallthru
      _
    // Predicated region
    $region10: #{tpu_custom_call.1} parent=1 // pred_check
      _
    $region11: #{tpu_custom_call.1} parent=1 // pred_check_branch
      %43 = sbr.rel (0) target = $region13
    $region12: #{tpu_custom_call.1} parent=1 // pred_region
      _
    $region13: #{tpu_custom_call.1} parent=1 // pred_fallthru
      _
    // Predicated region
    $region14: #{tpu_custom_call.1} parent=1 // pred_check
      _
    $region15: #{tpu_custom_call.1} parent=1 // pred_check_branch
      %45 = sbr.rel (0) target = $region17
    $region16: #{tpu_custom_call.1} parent=1 // pred_region
      %s47 = ssub.s32 4096, 4096
      %48 = vsyncadd [#allocation6], %s47
      %s49 = sshll.u32 [#allocation7], 4
      %s50 = int_to_ptr.vmem [resolvable:$true] %s49
      %55 = dma.hbm_to_vmem [thread:$0]  %s3, 4096, %s50, [#allocation6], 128, 128, 8
    $region17: #{tpu_custom_call.1} parent=1 // pred_fallthru
      _
    // Predicated region
    $region18: #{tpu_custom_call.1} parent=1 // pred_check
      _
    $region19: #{tpu_custom_call.1} parent=1 // pred_check_branch
      %57 = sbr.rel (0) target = $region21
    $region20: #{tpu_custom_call.1} parent=1 // pred_region
      _
    $region21: #{tpu_custom_call.1} parent=1 // pred_fallthru
      _
    // Predicated region
    $region22: #{tpu_custom_call.1} parent=1 // pred_check
      _
    $region23: #{tpu_custom_call.1} parent=1 // pred_check_branch
      %59 = sbr.rel (0) target = $region25
    $region24: #{tpu_custom_call.1} parent=1 // pred_region
      %s61 = ssub.s32 8192, 8192
      %62 = vsyncadd [#allocation9], %s61
      %s63 = sshll.u32 [#allocation8], 4
      %s64 = int_to_ptr.vmem [resolvable:$true] %s63
      %69 = dma.hbm_to_vmem [thread:$0]  %s5, 8192, %s64, [#allocation9], 256, 256, 16
    $region25: #{tpu_custom_call.1} parent=1 // pred_fallthru
      _
    // Predicated region
    $region26: #{tpu_custom_call.1} parent=1 // pred_check
      _
    $region27: #{tpu_custom_call.1} parent=1 // pred_check_branch
      %71 = sbr.rel (0) target = $region29
    $region28: #{tpu_custom_call.1} parent=1 // pred_region
      _
    $region29: #{tpu_custom_call.1} parent=1 // pred_fallthru
      _
    // Predicated region
    $region30: #{tpu_custom_call.1} parent=1 // pred_check
      _
    $region31: #{tpu_custom_call.1} parent=1 // pred_check_branch
      %73 = sbr.rel (0) target = $region33
    $region32: #{tpu_custom_call.1} parent=1 // pred_region
      %s75 = ssub.s32 4096, 4096
      %76 = vsyncadd [#allocation9], %s75
      %s77 = sshll.u32 [#allocation10], 4
      %s78 = int_to_ptr.vmem [resolvable:$true] %s77
      %83 = dma.hbm_to_vmem [thread:$0]  %s7, 4096, %s78, [#allocation9], 64, 64, 4
    $region33: #{tpu_custom_call.1} parent=1 // pred_fallthru
      _
    // Predicated region
    $region34: #{tpu_custom_call.1} parent=1 // pred_check
      _
    $region35: #{tpu_custom_call.1} parent=1 // pred_check_branch
      %85 = sbr.rel (0) target = $region37
    $region36: #{tpu_custom_call.1} parent=1 // pred_region
      _
    $region37: #{tpu_custom_call.1} parent=1 // pred_fallthru
      _
    // Predicated region
    $region38: #{tpu_custom_call.1} parent=1 // pred_check
      _
    $region39: #{tpu_custom_call.1} parent=1 // pred_check_branch
      %87 = sbr.rel (0) target = $region41
    $region40: #{tpu_custom_call.1} parent=1 // pred_region
      %88 = dma.done [#allocation3], 128
    $region41: #{tpu_custom_call.1} parent=1 // pred_fallthru
      _
    // Predicated region
    $region42: #{tpu_custom_call.1} parent=1 // pred_check
      _
    $region43: #{tpu_custom_call.1} parent=1 // pred_check_branch
      %90 = sbr.rel (0) target = $region45
    $region44: #{tpu_custom_call.1} parent=1 // pred_region
      %91 = dma.done [#allocation6], 3072
    $region45: #{tpu_custom_call.1} parent=1 // pred_fallthru
      _
    // Predicated region
    $region46: #{tpu_custom_call.1} parent=1 // pred_check
      _
    $region47: #{tpu_custom_call.1} parent=1 // pred_check_branch
      %93 = sbr.rel (0) target = $region49
    $region48: #{tpu_custom_call.1} parent=1 // pred_region
      %94 = dma.done [#allocation6], 4096
    $region49: #{tpu_custom_call.1} parent=1 // pred_fallthru
      _
    // Predicated region
    $region50: #{tpu_custom_call.1} parent=1 // pred_check
      _
    $region51: #{tpu_custom_call.1} parent=1 // pred_check_branch
      %96 = sbr.rel (0) target = $region53
    $region52: #{tpu_custom_call.1} parent=1 // pred_region
      %97 = dma.done [#allocation9], 8192
    $region53: #{tpu_custom_call.1} parent=1 // pred_fallthru
      _
    // Predicated region
    $region54: #{tpu_custom_call.1} parent=1 // pred_check
      _
    $region55: #{tpu_custom_call.1} parent=1 // pred_check_branch
      %99 = sbr.rel (0) target = $region57
    $region56: #{tpu_custom_call.1} parent=1 // pred_region
      %100 = dma.done [#allocation9], 4096
    $region57: #{tpu_custom_call.1} parent=1 // pred_fallthru
      _
    %v102 = vld [vmem:[#allocation2] sm:$0xf]
    %v103 = vld [vmem:[#allocation2 + $0x4] sm:$0xf]
    %v104 = vld [vmem:[#allocation5] sm:$0xff]
    %v105 = vld [vmem:[#allocation5 + $0x8] sm:$0xf]
    %v106 = vld [vmem:[#allocation5 + $0xc] sm:$0xff]
    %v107 = vld [vmem:[#allocation5 + $0x14] sm:$0xf]
    %v108 = vld [vmem:[#allocation5 + $0x18] sm:$0xff]
    %v109 = vld [vmem:[#allocation5 + $0x20] sm:$0xf]
    %v110 = vld [vmem:[#allocation5 + $0x24] sm:$0xff]
    %v111 = vld [vmem:[#allocation5 + $0x2c] sm:$0xf]
    %v112 = vld [vmem:[#allocation5 + $0x30] sm:$0xff]
    %v113 = vld [vmem:[#allocation5 + $0x38] sm:$0xf]
    %v114 = vld [vmem:[#allocation5 + $0x3c] sm:$0xff]
    %v115 = vld [vmem:[#allocation5 + $0x44] sm:$0xf]
    %v116 = vld [vmem:[#allocation5 + $0x48] sm:$0xff]
    %v117 = vld [vmem:[#allocation5 + $0x50] sm:$0xf]
    %v118 = vld [vmem:[#allocation5 + $0x54] sm:$0xff]
    %v119 = vld [vmem:[#allocation5 + $0x5c] sm:$0xf]
    %v120 = vld [vmem:[#allocation5 + $0x60] sm:$0xff]
    %v121 = vld [vmem:[#allocation5 + $0x68] sm:$0xf]
    %v122 = vld [vmem:[#allocation5 + $0x6c] sm:$0xff]
    %v123 = vld [vmem:[#allocation5 + $0x74] sm:$0xf]
    %v124 = vld [vmem:[#allocation5 + $0x78] sm:$0xff]
    %v125 = vld [vmem:[#allocation5 + $0x80] sm:$0xf]
    %v126 = vld [vmem:[#allocation5 + $0x84] sm:$0xff]
    %v127 = vld [vmem:[#allocation5 + $0x8c] sm:$0xf]
    %v128 = vld [vmem:[#allocation5 + $0x90] sm:$0xff]
    %v129 = vld [vmem:[#allocation5 + $0x98] sm:$0xf]
    %v130 = vld [vmem:[#allocation5 + $0x9c] sm:$0xff]
    %v131 = vld [vmem:[#allocation5 + $0xa4] sm:$0xf]
    %v132 = vld [vmem:[#allocation5 + $0xa8] sm:$0xff]
    %v133 = vld [vmem:[#allocation5 + $0xb0] sm:$0xf]
    %v134 = vld [vmem:[#allocation5 + $0xb4] sm:$0xff]
    %v135 = vld [vmem:[#allocation5 + $0xbc] sm:$0xf]
    %v138 = vunpack.c.l.b16 %v102
    %v139 = vunpack.c.l.b16 %v103
    %v140 = vpack.c.b16 %v139, %v138
    %v174 = vunpack.c.l.b16 %v104
    %v175 = vunpack.c.h.b16 %v104
    %v176 = vunpack.c.l.b16 %v105
    %v177 = vunpack.c.l.b16 %v106
    %v178 = vunpack.c.h.b16 %v106
    %v179 = vunpack.c.l.b16 %v107
    %v180 = vunpack.c.l.b16 %v108
    %v181 = vunpack.c.h.b16 %v108
    %v182 = vunpack.c.l.b16 %v109
    %v183 = vunpack.c.l.b16 %v110
    %v184 = vunpack.c.h.b16 %v110
    %v185 = vunpack.c.l.b16 %v111
    %v186 = vunpack.c.l.b16 %v112
    %v187 = vunpack.c.h.b16 %v112
    %v188 = vunpack.c.l.b16 %v113
    %v189 = vunpack.c.l.b16 %v114
    %v190 = vunpack.c.h.b16 %v114
    %v191 = vunpack.c.l.b16 %v115
    %v192 = vunpack.c.l.b16 %v116
    %v193 = vunpack.c.h.b16 %v116
    %v194 = vunpack.c.l.b16 %v117
    %v195 = vunpack.c.l.b16 %v118
    %v196 = vunpack.c.h.b16 %v118
    %v197 = vunpack.c.l.b16 %v119
    %v198 = vunpack.c.l.b16 %v120
    %v199 = vunpack.c.h.b16 %v120
    %v200 = vunpack.c.l.b16 %v121
    %v201 = vunpack.c.l.b16 %v122
    %v202 = vunpack.c.h.b16 %v122
    %v203 = vunpack.c.l.b16 %v123
    %v204 = vunpack.c.l.b16 %v124
    %v205 = vunpack.c.h.b16 %v124
    %v206 = vunpack.c.l.b16 %v125
    %v207 = vunpack.c.l.b16 %v126
    %v208 = vunpack.c.h.b16 %v126
    %v209 = vunpack.c.l.b16 %v127
    %v210 = vunpack.c.l.b16 %v128
    %v211 = vunpack.c.h.b16 %v128
    %v212 = vunpack.c.l.b16 %v129
    %v213 = vunpack.c.l.b16 %v130
    %v214 = vunpack.c.h.b16 %v130
    %v215 = vunpack.c.l.b16 %v131
    %v216 = vunpack.c.l.b16 %v132
    %v217 = vunpack.c.h.b16 %v132
    %v218 = vunpack.c.l.b16 %v133
    %v219 = vunpack.c.l.b16 %v134
    %v220 = vunpack.c.h.b16 %v134
    %v221 = vunpack.c.l.b16 %v135
    %v222 = vpack.c.b16 %v177, %v174
    %v223 = vpack.c.b16 %v178, %v175
    %v224 = vpack.c.b16 %v179, %v176
    %v225 = vpack.c.b16 %v183, %v180
    %v226 = vpack.c.b16 %v184, %v181
    %v227 = vpack.c.b16 %v185, %v182
    %v228 = vpack.c.b16 %v189, %v186
    %v229 = vpack.c.b16 %v190, %v187
    %v230 = vpack.c.b16 %v191, %v188
    %v231 = vpack.c.b16 %v195, %v192
    %v232 = vpack.c.b16 %v196, %v193
    %v233 = vpack.c.b16 %v197, %v194
    %v234 = vpack.c.b16 %v201, %v198
    %v235 = vpack.c.b16 %v202, %v199
    %v236 = vpack.c.b16 %v203, %v200
    %v237 = vpack.c.b16 %v207, %v204
    %v238 = vpack.c.b16 %v208, %v205
    %v239 = vpack.c.b16 %v209, %v206
    %v240 = vpack.c.b16 %v213, %v210
    %v241 = vpack.c.b16 %v214, %v211
    %v242 = vpack.c.b16 %v215, %v212
    %v243 = vpack.c.b16 %v219, %v216
    %v244 = vpack.c.b16 %v220, %v217
    %v245 = vpack.c.b16 %v221, %v218
    %270 = vmatprep.subr.bf16.mxu0 %v223
    %271 = vmatpush1.bf16.msra.mxu0 %v222
    %272 = vmatprep.subr.bf16.mxu0 %v226
    %273 = vmatpush1.bf16.msra.mxu0 %v225
    %274 = vmatprep.subr.bf16.mxu0 %v229
    %275 = vmatpush1.bf16.msra.mxu0 %v228
    %276 = vmatprep.subr.bf16.mxu0 %v232
    %277 = vmatpush1.bf16.msra.mxu0 %v231
    %278 = vmatprep.subr.bf16.mxu0 %v235
    %279 = vmatpush1.bf16.msra.mxu0 %v234
    %280 = vmatprep.subr.bf16.mxu0 %v238
    %281 = vmatpush1.bf16.msra.mxu0 %v237
    %282 = vmatprep.subr.bf16.mxu0 %v241
    %283 = vmatpush1.bf16.msra.mxu0 %v240
    %284 = vmatprep.subr.bf16.mxu0 %v244
    %285 = vmatpush1.bf16.msra.mxu0 %v243
    %286 = vmatprep.subr.bf16.mxu0 0
    %287 = vmatpush1.bf16.msra.mxu0 0
    %288 = vmatprep.subr.bf16.mxu0 0
    %289 = vmatpush1.bf16.msra.mxu0 0
    %290 = vmatprep.subr.bf16.mxu0 0
    %291 = vmatpush1.bf16.msra.mxu0 0
    %292 = vmatprep.subr.bf16.mxu0 0
    %293 = vmatpush1.bf16.msra.mxu0 0
    %294 = vmatprep.subr.bf16.mxu0 0
    %295 = vmatpush1.bf16.msra.mxu0 0
    %296 = vmatprep.subr.bf16.mxu0 0
    %297 = vmatpush1.bf16.msra.mxu0 0
    %298 = vmatprep.subr.bf16.mxu0 0
    %299 = vmatpush1.bf16.msra.mxu0 0
    %300 = vmatprep.subr.bf16.mxu0 0
    %301 = vmatpush1.bf16.msra.mxu0 0
    %302 = vmatprep.mubr.bf16.mxu0 0
    %303 = vmatmul.mubr.bf16.gmra.mrb[0].mxu0 %v140
    %v304 = vpop.f32.mrb[0].mxu0
    %v305 = vadd.f32 0.0, %v304
    %v306 = vpop.f32.mrb[0].mxu0
    %v307 = vadd.f32 0.0, %v306
    %v308 = vpop.f32.mrb[0].mxu0
    %v309 = vadd.f32 0.0, %v308
    %v310 = vpop.f32.mrb[0].mxu0
    %v311 = vadd.f32 0.0, %v310
    %312 = vdwg.mxu0
    %313 = vmatprep.subr.bf16.mxu0 0
    %314 = vmatpush1.bf16.msra.mxu0 %v224
    %315 = vmatprep.subr.bf16.mxu0 0
    %316 = vmatpush1.bf16.msra.mxu0 %v227
    %317 = vmatprep.subr.bf16.mxu0 0
    %318 = vmatpush1.bf16.msra.mxu0 %v230
    %319 = vmatprep.subr.bf16.mxu0 0
    %320 = vmatpush1.bf16.msra.mxu0 %v233
    %321 = vmatprep.subr.bf16.mxu0 0
    %322 = vmatpush1.bf16.msra.mxu0 %v236
    %323 = vmatprep.subr.bf16.mxu0 0
    %324 = vmatpush1.bf16.msra.mxu0 %v239
    %325 = vmatprep.subr.bf16.mxu0 0
    %326 = vmatpush1.bf16.msra.mxu0 %v242
    %327 = vmatprep.subr.bf16.mxu0 0
    %328 = vmatpush1.bf16.msra.mxu0 %v245
    %329 = vmatprep.subr.bf16.mxu0 0
    %330 = vmatpush1.bf16.msra.mxu0 0
    %331 = vmatprep.subr.bf16.mxu0 0
    %332 = vmatpush1.bf16.msra.mxu0 0
    %333 = vmatprep.subr.bf16.mxu0 0
    %334 = vmatpush1.bf16.msra.mxu0 0
    %335 = vmatprep.subr.bf16.mxu0 0
    %336 = vmatpush1.bf16.msra.mxu0 0
    %337 = vmatprep.subr.bf16.mxu0 0
    %338 = vmatpush1.bf16.msra.mxu0 0
    %339 = vmatprep.subr.bf16.mxu0 0
    %340 = vmatpush1.bf16.msra.mxu0 0
    %341 = vmatprep.subr.bf16.mxu0 0
    %342 = vmatpush1.bf16.msra.mxu0 0
    %343 = vmatprep.subr.bf16.mxu0 0
    %344 = vmatpush1.bf16.msra.mxu0 0
    %345 = vmatprep.mubr.bf16.mxu0 0
    %346 = vmatmul.mubr.bf16.gmra.mrb[0].mxu0 %v140
    %v347 = vpop.f32.mrb[0].mxu0
    %v348 = vadd.f32 0.0, %v347
    %v349 = vpop.f32.mrb[0].mxu0
    %v350 = vpop.f32.mrb[0].mxu0
    %v351 = vadd.f32 0.0, %v350
    %v352 = vpop.f32.mrb[0].mxu0
    %353 = vdwg.mxu0
    %v354 = vld [vmem:[%s2] sm:$0x3]
    %v356 = vlaneseq
    %v357 = vshrl.u32 %v356, 7
    %v358 = vsub.s32 0, %v357
    %v359 = vrot.slane %v354, %v358
    %v360 = vlaneseq
    %v361 = vshrl.u32 %v360, 7
    %v362 = vsub.s32 1, %v361
    %v363 = vrot.slane %v354, %v362
    %v366 = vadd.f32 %v305, %v359
    %v367 = vadd.f32 %v307, %v363
    %v368 = vadd.f32 %v309, %v359
    %v369 = vadd.f32 %v311, %v363
    %v370 = vmax.f32 %v366, 0.0
    %v371 = vmax.f32 %v367, 0.0
    %v372 = vmax.f32 %v368, 0.0
    %v373 = vmax.f32 %v369, 0.0
    %v374 = vpack.c.bf16 %v372, %v370
    %v375 = vpack.c.bf16 %v373, %v371
    %v376 = vld [vmem:[#allocation7] sm:$0xff]
    %v377 = vld [vmem:[#allocation7 + $0x8] sm:$0xff]
    %v378 = vld [vmem:[#allocation7 + $0x10] sm:$0xff]
    %v379 = vld [vmem:[#allocation7 + $0x18] sm:$0xff]
    %v380 = vld [vmem:[#allocation7 + $0x20] sm:$0xff]
    %v381 = vld [vmem:[#allocation7 + $0x28] sm:$0xff]
    %v382 = vld [vmem:[#allocation7 + $0x30] sm:$0xff]
    %v383 = vld [vmem:[#allocation7 + $0x38] sm:$0xff]
    %v384 = vld [vmem:[#allocation7 + $0x40] sm:$0xff]
    %v385 = vld [vmem:[#allocation7 + $0x48] sm:$0xff]
    %v386 = vld [vmem:[#allocation7 + $0x50] sm:$0xff]
    %v387 = vld [vmem:[#allocation7 + $0x58] sm:$0xff]
    %v388 = vld [vmem:[#allocation7 + $0x60] sm:$0xff]
    %v389 = vld [vmem:[#allocation7 + $0x68] sm:$0xff]
    %v390 = vld [vmem:[#allocation7 + $0x70] sm:$0xff]
    %v391 = vld [vmem:[#allocation7 + $0x78] sm:$0xff]
    %v392 = vld [vmem:[#allocation7 + $0x80] sm:$0xff]
    %v393 = vld [vmem:[#allocation7 + $0x88] sm:$0xff]
    %v394 = vld [vmem:[#allocation7 + $0x90] sm:$0xff]
    %v395 = vld [vmem:[#allocation7 + $0x98] sm:$0xff]
    %v396 = vld [vmem:[#allocation7 + $0xa0] sm:$0xff]
    %v397 = vld [vmem:[#allocation7 + $0xa8] sm:$0xff]
    %v398 = vld [vmem:[#allocation7 + $0xb0] sm:$0xff]
    %v399 = vld [vmem:[#allocation7 + $0xb8] sm:$0xff]
    %v400 = vld [vmem:[#allocation7 + $0xc0] sm:$0xff]
    %v401 = vld [vmem:[#allocation7 + $0xc8] sm:$0xff]
    %v402 = vld [vmem:[#allocation7 + $0xd0] sm:$0xff]
    %v403 = vld [vmem:[#allocation7 + $0xd8] sm:$0xff]
    %v404 = vld [vmem:[#allocation7 + $0xe0] sm:$0xff]
    %v405 = vld [vmem:[#allocation7 + $0xe8] sm:$0xff]
    %v406 = vld [vmem:[#allocation7 + $0xf0] sm:$0xff]
    %v407 = vld [vmem:[#allocation7 + $0xf8] sm:$0xff]
    %v408 = vld [vmem:[%s4] sm:$0x3]
    %v410 = vlaneseq
    %v411 = vshrl.u32 %v410, 7
    %v412 = vsub.s32 0, %v411
    %v413 = vrot.slane %v408, %v412
    %v414 = vlaneseq
    %v415 = vshrl.u32 %v414, 7
    %v416 = vsub.s32 1, %v415
    %v417 = vrot.slane %v408, %v416
    %v452 = vunpack.c.l.b16 %v376
    %v453 = vunpack.c.h.b16 %v376
    %v454 = vunpack.c.l.b16 %v377
    %v455 = vunpack.c.h.b16 %v377
    %v456 = vunpack.c.l.b16 %v378
    %v457 = vunpack.c.h.b16 %v378
    %v458 = vunpack.c.l.b16 %v379
    %v459 = vunpack.c.h.b16 %v379
    %v460 = vunpack.c.l.b16 %v380
    %v461 = vunpack.c.h.b16 %v380
    %v462 = vunpack.c.l.b16 %v381
    %v463 = vunpack.c.h.b16 %v381
    %v464 = vunpack.c.l.b16 %v382
    %v465 = vunpack.c.h.b16 %v382
    %v466 = vunpack.c.l.b16 %v383
    %v467 = vunpack.c.h.b16 %v383
    %v468 = vunpack.c.l.b16 %v384
    %v469 = vunpack.c.h.b16 %v384
    %v470 = vunpack.c.l.b16 %v385
    %v471 = vunpack.c.h.b16 %v385
    %v472 = vunpack.c.l.b16 %v386
    %v473 = vunpack.c.h.b16 %v386
    %v474 = vunpack.c.l.b16 %v387
    %v475 = vunpack.c.h.b16 %v387
    %v476 = vunpack.c.l.b16 %v388
    %v477 = vunpack.c.h.b16 %v388
    %v478 = vunpack.c.l.b16 %v389
    %v479 = vunpack.c.h.b16 %v389
    %v480 = vunpack.c.l.b16 %v390
    %v481 = vunpack.c.h.b16 %v390
    %v482 = vunpack.c.l.b16 %v391
    %v483 = vunpack.c.h.b16 %v391
    %v484 = vunpack.c.l.b16 %v392
    %v485 = vunpack.c.h.b16 %v392
    %v486 = vunpack.c.l.b16 %v393
    %v487 = vunpack.c.h.b16 %v393
    %v488 = vunpack.c.l.b16 %v394
    %v489 = vunpack.c.h.b16 %v394
    %v490 = vunpack.c.l.b16 %v395
    %v491 = vunpack.c.h.b16 %v395
    %v492 = vunpack.c.l.b16 %v396
    %v493 = vunpack.c.h.b16 %v396
    %v494 = vunpack.c.l.b16 %v397
    %v495 = vunpack.c.h.b16 %v397
    %v496 = vunpack.c.l.b16 %v398
    %v497 = vunpack.c.h.b16 %v398
    %v498 = vunpack.c.l.b16 %v399
    %v499 = vunpack.c.h.b16 %v399
    %v500 = vunpack.c.l.b16 %v400
    %v501 = vunpack.c.h.b16 %v400
    %v502 = vunpack.c.l.b16 %v401
    %v503 = vunpack.c.h.b16 %v401
    %v504 = vunpack.c.l.b16 %v402
    %v505 = vunpack.c.h.b16 %v402
    %v506 = vunpack.c.l.b16 %v403
    %v507 = vunpack.c.h.b16 %v403
    %v508 = vunpack.c.l.b16 %v404
    %v509 = vunpack.c.h.b16 %v404
    %v510 = vunpack.c.l.b16 %v405
    %v511 = vunpack.c.h.b16 %v405
    %v512 = vunpack.c.l.b16 %v406
    %v513 = vunpack.c.h.b16 %v406
    %v514 = vunpack.c.l.b16 %v407
    %v515 = vunpack.c.h.b16 %v407
    %v516 = vpack.c.b16 %v454, %v452
    %v517 = vpack.c.b16 %v455, %v453
    %v518 = vpack.c.b16 %v458, %v456
    %v519 = vpack.c.b16 %v459, %v457
    %v520 = vpack.c.b16 %v462, %v460
    %v521 = vpack.c.b16 %v463, %v461
    %v522 = vpack.c.b16 %v466, %v464
    %v523 = vpack.c.b16 %v467, %v465
    %v524 = vpack.c.b16 %v470, %v468
    %v525 = vpack.c.b16 %v471, %v469
    %v526 = vpack.c.b16 %v474, %v472
    %v527 = vpack.c.b16 %v475, %v473
    %v528 = vpack.c.b16 %v478, %v476
    %v529 = vpack.c.b16 %v479, %v477
    %v530 = vpack.c.b16 %v482, %v480
    %v531 = vpack.c.b16 %v483, %v481
    %v532 = vpack.c.b16 %v486, %v484
    %v533 = vpack.c.b16 %v487, %v485
    %v534 = vpack.c.b16 %v490, %v488
    %v535 = vpack.c.b16 %v491, %v489
    %v536 = vpack.c.b16 %v494, %v492
    %v537 = vpack.c.b16 %v495, %v493
    %v538 = vpack.c.b16 %v498, %v496
    %v539 = vpack.c.b16 %v499, %v497
    %v540 = vpack.c.b16 %v502, %v500
    %v541 = vpack.c.b16 %v503, %v501
    %v542 = vpack.c.b16 %v506, %v504
    %v543 = vpack.c.b16 %v507, %v505
    %v544 = vpack.c.b16 %v510, %v508
    %v545 = vpack.c.b16 %v511, %v509
    %v546 = vpack.c.b16 %v514, %v512
    %v547 = vpack.c.b16 %v515, %v513
    %580 = vmatprep.subr.bf16.mxu0 %v517
    %581 = vmatpush1.bf16.msra.mxu0 %v516
    %582 = vmatprep.subr.bf16.mxu0 %v519
    %583 = vmatpush1.bf16.msra.mxu0 %v518
    %584 = vmatprep.subr.bf16.mxu0 %v521
    %585 = vmatpush1.bf16.msra.mxu0 %v520
    %586 = vmatprep.subr.bf16.mxu0 %v523
    %587 = vmatpush1.bf16.msra.mxu0 %v522
    %588 = vmatprep.subr.bf16.mxu0 %v525
    %589 = vmatpush1.bf16.msra.mxu0 %v524
    %590 = vmatprep.subr.bf16.mxu0 %v527
    %591 = vmatpush1.bf16.msra.mxu0 %v526
    %592 = vmatprep.subr.bf16.mxu0 %v529
    %593 = vmatpush1.bf16.msra.mxu0 %v528
    %594 = vmatprep.subr.bf16.mxu0 %v531
    %595 = vmatpush1.bf16.msra.mxu0 %v530
    %596 = vmatprep.subr.bf16.mxu0 %v533
    %597 = vmatpush1.bf16.msra.mxu0 %v532
    %598 = vmatprep.subr.bf16.mxu0 %v535
    %599 = vmatpush1.bf16.msra.mxu0 %v534
    %600 = vmatprep.subr.bf16.mxu0 %v537
    %601 = vmatpush1.bf16.msra.mxu0 %v536
    %602 = vmatprep.subr.bf16.mxu0 %v539
    %603 = vmatpush1.bf16.msra.mxu0 %v538
    %604 = vmatprep.subr.bf16.mxu0 %v541
    %605 = vmatpush1.bf16.msra.mxu0 %v540
    %606 = vmatprep.subr.bf16.mxu0 %v543
    %607 = vmatpush1.bf16.msra.mxu0 %v542
    %608 = vmatprep.subr.bf16.mxu0 %v545
    %609 = vmatpush1.bf16.msra.mxu0 %v544
    %610 = vmatprep.subr.bf16.mxu0 %v547
    %611 = vmatpush1.bf16.msra.mxu0 %v546
    %612 = vmatprep.mubr.bf16.mxu0 %v375
    %613 = vmatmul.mubr.bf16.gmra.mrb[0].mxu0 %v374
    %v614 = vpop.f32.mrb[0].mxu0
    %v615 = vadd.f32 %v413, %v614
    %v616 = vpop.f32.mrb[0].mxu0
    %v617 = vadd.f32 %v417, %v616
    %v618 = vpop.f32.mrb[0].mxu0
    %v619 = vadd.f32 %v413, %v618
    %v620 = vpop.f32.mrb[0].mxu0
    %v621 = vadd.f32 %v417, %v620
    %622 = vdwg.mxu0
    %v623 = vmax.f32 %v615, 0.0
    %v624 = vmax.f32 %v617, 0.0
    %v625 = vmax.f32 %v619, 0.0
    %v626 = vmax.f32 %v621, 0.0
    %v627 = vpack.c.bf16 %v625, %v623
    %v628 = vpack.c.bf16 %v626, %v624
    %v629 = vld [vmem:[#allocation8] sm:$0xff]
    %v630 = vld [vmem:[#allocation8 + $0x8] sm:$0xff]
    %v631 = vld [vmem:[#allocation8 + $0x10] sm:$0xff]
    %v632 = vld [vmem:[#allocation8 + $0x18] sm:$0xff]
    %v633 = vld [vmem:[#allocation8 + $0x20] sm:$0xff]
    %v634 = vld [vmem:[#allocation8 + $0x28] sm:$0xff]
    %v635 = vld [vmem:[#allocation8 + $0x30] sm:$0xff]
    %v636 = vld [vmem:[#allocation8 + $0x38] sm:$0xff]
    %v637 = vld [vmem:[#allocation8 + $0x40] sm:$0xff]
    %v638 = vld [vmem:[#allocation8 + $0x48] sm:$0xff]
    %v639 = vld [vmem:[#allocation8 + $0x50] sm:$0xff]
    %v640 = vld [vmem:[#allocation8 + $0x58] sm:$0xff]
    %v641 = vld [vmem:[#allocation8 + $0x60] sm:$0xff]
    %v642 = vld [vmem:[#allocation8 + $0x68] sm:$0xff]
    %v643 = vld [vmem:[#allocation8 + $0x70] sm:$0xff]
    %v644 = vld [vmem:[#allocation8 + $0x78] sm:$0xff]
    %v645 = vld [vmem:[#allocation8 + $0x80] sm:$0xff]
    %v646 = vld [vmem:[#allocation8 + $0x88] sm:$0xff]
    %v647 = vld [vmem:[#allocation8 + $0x90] sm:$0xff]
    %v648 = vld [vmem:[#allocation8 + $0x98] sm:$0xff]
    %v649 = vld [vmem:[#allocation8 + $0xa0] sm:$0xff]
    %v650 = vld [vmem:[#allocation8 + $0xa8] sm:$0xff]
    %v651 = vld [vmem:[#allocation8 + $0xb0] sm:$0xff]
    %v652 = vld [vmem:[#allocation8 + $0xb8] sm:$0xff]
    %v653 = vld [vmem:[#allocation8 + $0xc0] sm:$0xff]
    %v654 = vld [vmem:[#allocation8 + $0xc8] sm:$0xff]
    %v655 = vld [vmem:[#allocation8 + $0xd0] sm:$0xff]
    %v656 = vld [vmem:[#allocation8 + $0xd8] sm:$0xff]
    %v657 = vld [vmem:[#allocation8 + $0xe0] sm:$0xff]
    %v658 = vld [vmem:[#allocation8 + $0xe8] sm:$0xff]
    %v659 = vld [vmem:[#allocation8 + $0xf0] sm:$0xff]
    %v660 = vld [vmem:[#allocation8 + $0xf8] sm:$0xff]
    %v661 = vld [vmem:[#allocation8 + $0x100] sm:$0xff]
    %v662 = vld [vmem:[#allocation8 + $0x108] sm:$0xff]
    %v663 = vld [vmem:[#allocation8 + $0x110] sm:$0xff]
    %v664 = vld [vmem:[#allocation8 + $0x118] sm:$0xff]
    %v665 = vld [vmem:[#allocation8 + $0x120] sm:$0xff]
    %v666 = vld [vmem:[#allocation8 + $0x128] sm:$0xff]
    %v667 = vld [vmem:[#allocation8 + $0x130] sm:$0xff]
    %v668 = vld [vmem:[#allocation8 + $0x138] sm:$0xff]
    %v669 = vld [vmem:[#allocation8 + $0x140] sm:$0xff]
    %v670 = vld [vmem:[#allocation8 + $0x148] sm:$0xff]
    %v671 = vld [vmem:[#allocation8 + $0x150] sm:$0xff]
    %v672 = vld [vmem:[#allocation8 + $0x158] sm:$0xff]
    %v673 = vld [vmem:[#allocation8 + $0x160] sm:$0xff]
    %v674 = vld [vmem:[#allocation8 + $0x168] sm:$0xff]
    %v675 = vld [vmem:[#allocation8 + $0x170] sm:$0xff]
    %v676 = vld [vmem:[#allocation8 + $0x178] sm:$0xff]
    %v677 = vld [vmem:[#allocation8 + $0x180] sm:$0xff]
    %v678 = vld [vmem:[#allocation8 + $0x188] sm:$0xff]
    %v679 = vld [vmem:[#allocation8 + $0x190] sm:$0xff]
    %v680 = vld [vmem:[#allocation8 + $0x198] sm:$0xff]
    %v681 = vld [vmem:[#allocation8 + $0x1a0] sm:$0xff]
    %v682 = vld [vmem:[#allocation8 + $0x1a8] sm:$0xff]
    %v683 = vld [vmem:[#allocation8 + $0x1b0] sm:$0xff]
    %v684 = vld [vmem:[#allocation8 + $0x1b8] sm:$0xff]
    %v685 = vld [vmem:[#allocation8 + $0x1c0] sm:$0xff]
    %v686 = vld [vmem:[#allocation8 + $0x1c8] sm:$0xff]
    %v687 = vld [vmem:[#allocation8 + $0x1d0] sm:$0xff]
    %v688 = vld [vmem:[#allocation8 + $0x1d8] sm:$0xff]
    %v689 = vld [vmem:[#allocation8 + $0x1e0] sm:$0xff]
    %v690 = vld [vmem:[#allocation8 + $0x1e8] sm:$0xff]
    %v691 = vld [vmem:[#allocation8 + $0x1f0] sm:$0xff]
    %v692 = vld [vmem:[#allocation8 + $0x1f8] sm:$0xff]
    %v693 = vld [vmem:[%s6] sm:$0xf]
    %v695 = vlaneseq
    %v696 = vshrl.u32 %v695, 7
    %v697 = vsub.s32 0, %v696
    %v698 = vrot.slane %v693, %v697
    %v699 = vlaneseq
    %v700 = vshrl.u32 %v699, 7
    %v701 = vsub.s32 1, %v700
    %v702 = vrot.slane %v693, %v701
    %v703 = vlaneseq
    %v704 = vshrl.u32 %v703, 7
    %v705 = vsub.s32 2, %v704
    %v706 = vrot.slane %v693, %v705
    %v707 = vlaneseq
    %v708 = vshrl.u32 %v707, 7
    %v709 = vsub.s32 3, %v708
    %v710 = vrot.slane %v693, %v709
    %v779 = vunpack.c.l.b16 %v629
    %v780 = vunpack.c.h.b16 %v629
    %v781 = vunpack.c.l.b16 %v630
    %v782 = vunpack.c.h.b16 %v630
    %v783 = vunpack.c.l.b16 %v631
    %v784 = vunpack.c.h.b16 %v631
    %v785 = vunpack.c.l.b16 %v632
    %v786 = vunpack.c.h.b16 %v632
    %v787 = vunpack.c.l.b16 %v633
    %v788 = vunpack.c.h.b16 %v633
    %v789 = vunpack.c.l.b16 %v634
    %v790 = vunpack.c.h.b16 %v634
    %v791 = vunpack.c.l.b16 %v635
    %v792 = vunpack.c.h.b16 %v635
    %v793 = vunpack.c.l.b16 %v636
    %v794 = vunpack.c.h.b16 %v636
    %v795 = vunpack.c.l.b16 %v637
    %v796 = vunpack.c.h.b16 %v637
    %v797 = vunpack.c.l.b16 %v638
    %v798 = vunpack.c.h.b16 %v638
    %v799 = vunpack.c.l.b16 %v639
    %v800 = vunpack.c.h.b16 %v639
    %v801 = vunpack.c.l.b16 %v640
    %v802 = vunpack.c.h.b16 %v640
    %v803 = vunpack.c.l.b16 %v641
    %v804 = vunpack.c.h.b16 %v641
    %v805 = vunpack.c.l.b16 %v642
    %v806 = vunpack.c.h.b16 %v642
    %v807 = vunpack.c.l.b16 %v643
    %v808 = vunpack.c.h.b16 %v643
    %v809 = vunpack.c.l.b16 %v644
    %v810 = vunpack.c.h.b16 %v644
    %v811 = vunpack.c.l.b16 %v645
    %v812 = vunpack.c.h.b16 %v645
    %v813 = vunpack.c.l.b16 %v646
    %v814 = vunpack.c.h.b16 %v646
    %v815 = vunpack.c.l.b16 %v647
    %v816 = vunpack.c.h.b16 %v647
    %v817 = vunpack.c.l.b16 %v648
    %v818 = vunpack.c.h.b16 %v648
    %v819 = vunpack.c.l.b16 %v649
    %v820 = vunpack.c.h.b16 %v649
    %v821 = vunpack.c.l.b16 %v650
    %v822 = vunpack.c.h.b16 %v650
    %v823 = vunpack.c.l.b16 %v651
    %v824 = vunpack.c.h.b16 %v651
    %v825 = vunpack.c.l.b16 %v652
    %v826 = vunpack.c.h.b16 %v652
    %v827 = vunpack.c.l.b16 %v653
    %v828 = vunpack.c.h.b16 %v653
    %v829 = vunpack.c.l.b16 %v654
    %v830 = vunpack.c.h.b16 %v654
    %v831 = vunpack.c.l.b16 %v655
    %v832 = vunpack.c.h.b16 %v655
    %v833 = vunpack.c.l.b16 %v656
    %v834 = vunpack.c.h.b16 %v656
    %v835 = vunpack.c.l.b16 %v657
    %v836 = vunpack.c.h.b16 %v657
    %v837 = vunpack.c.l.b16 %v658
    %v838 = vunpack.c.h.b16 %v658
    %v839 = vunpack.c.l.b16 %v659
    %v840 = vunpack.c.h.b16 %v659
    %v841 = vunpack.c.l.b16 %v660
    %v842 = vunpack.c.h.b16 %v660
    %v843 = vunpack.c.l.b16 %v661
    %v844 = vunpack.c.h.b16 %v661
    %v845 = vunpack.c.l.b16 %v662
    %v846 = vunpack.c.h.b16 %v662
    %v847 = vunpack.c.l.b16 %v663
    %v848 = vunpack.c.h.b16 %v663
    %v849 = vunpack.c.l.b16 %v664
    %v850 = vunpack.c.h.b16 %v664
    %v851 = vunpack.c.l.b16 %v665
    %v852 = vunpack.c.h.b16 %v665
    %v853 = vunpack.c.l.b16 %v666
    %v854 = vunpack.c.h.b16 %v666
    %v855 = vunpack.c.l.b16 %v667
    %v856 = vunpack.c.h.b16 %v667
    %v857 = vunpack.c.l.b16 %v668
    %v858 = vunpack.c.h.b16 %v668
    %v859 = vunpack.c.l.b16 %v669
    %v860 = vunpack.c.h.b16 %v669
    %v861 = vunpack.c.l.b16 %v670
    %v862 = vunpack.c.h.b16 %v670
    %v863 = vunpack.c.l.b16 %v671
    %v864 = vunpack.c.h.b16 %v671
    %v865 = vunpack.c.l.b16 %v672
    %v866 = vunpack.c.h.b16 %v672
    %v867 = vunpack.c.l.b16 %v673
    %v868 = vunpack.c.h.b16 %v673
    %v869 = vunpack.c.l.b16 %v674
    %v870 = vunpack.c.h.b16 %v674
    %v871 = vunpack.c.l.b16 %v675
    %v872 = vunpack.c.h.b16 %v675
    %v873 = vunpack.c.l.b16 %v676
    %v874 = vunpack.c.h.b16 %v676
    %v875 = vunpack.c.l.b16 %v677
    %v876 = vunpack.c.h.b16 %v677
    %v877 = vunpack.c.l.b16 %v678
    %v878 = vunpack.c.h.b16 %v678
    %v879 = vunpack.c.l.b16 %v679
    %v880 = vunpack.c.h.b16 %v679
    %v881 = vunpack.c.l.b16 %v680
    %v882 = vunpack.c.h.b16 %v680
    %v883 = vunpack.c.l.b16 %v681
    %v884 = vunpack.c.h.b16 %v681
    %v885 = vunpack.c.l.b16 %v682
    %v886 = vunpack.c.h.b16 %v682
    %v887 = vunpack.c.l.b16 %v683
    %v888 = vunpack.c.h.b16 %v683
    %v889 = vunpack.c.l.b16 %v684
    %v890 = vunpack.c.h.b16 %v684
    %v891 = vunpack.c.l.b16 %v685
    %v892 = vunpack.c.h.b16 %v685
    %v893 = vunpack.c.l.b16 %v686
    %v894 = vunpack.c.h.b16 %v686
    %v895 = vunpack.c.l.b16 %v687
    %v896 = vunpack.c.h.b16 %v687
    %v897 = vunpack.c.l.b16 %v688
    %v898 = vunpack.c.h.b16 %v688
    %v899 = vunpack.c.l.b16 %v689
    %v900 = vunpack.c.h.b16 %v689
    %v901 = vunpack.c.l.b16 %v690
    %v902 = vunpack.c.h.b16 %v690
    %v903 = vunpack.c.l.b16 %v691
    %v904 = vunpack.c.h.b16 %v691
    %v905 = vunpack.c.l.b16 %v692
    %v906 = vunpack.c.h.b16 %v692
    %v907 = vpack.c.b16 %v783, %v779
    %v908 = vpack.c.b16 %v784, %v780
    %v909 = vpack.c.b16 %v785, %v781
    %v910 = vpack.c.b16 %v786, %v782
    %v911 = vpack.c.b16 %v791, %v787
    %v912 = vpack.c.b16 %v792, %v788
    %v913 = vpack.c.b16 %v793, %v789
    %v914 = vpack.c.b16 %v794, %v790
    %v915 = vpack.c.b16 %v799, %v795
    %v916 = vpack.c.b16 %v800, %v796
    %v917 = vpack.c.b16 %v801, %v797
    %v918 = vpack.c.b16 %v802, %v798
    %v919 = vpack.c.b16 %v807, %v803
    %v920 = vpack.c.b16 %v808, %v804
    %v921 = vpack.c.b16 %v809, %v805
    %v922 = vpack.c.b16 %v810, %v806
    %v923 = vpack.c.b16 %v815, %v811
    %v924 = vpack.c.b16 %v816, %v812
    %v925 = vpack.c.b16 %v817, %v813
    %v926 = vpack.c.b16 %v818, %v814
    %v927 = vpack.c.b16 %v823, %v819
    %v928 = vpack.c.b16 %v824, %v820
    %v929 = vpack.c.b16 %v825, %v821
    %v930 = vpack.c.b16 %v826, %v822
    %v931 = vpack.c.b16 %v831, %v827
    %v932 = vpack.c.b16 %v832, %v828
    %v933 = vpack.c.b16 %v833, %v829
    %v934 = vpack.c.b16 %v834, %v830
    %v935 = vpack.c.b16 %v839, %v835
    %v936 = vpack.c.b16 %v840, %v836
    %v937 = vpack.c.b16 %v841, %v837
    %v938 = vpack.c.b16 %v842, %v838
    %v939 = vpack.c.b16 %v847, %v843
    %v940 = vpack.c.b16 %v848, %v844
    %v941 = vpack.c.b16 %v849, %v845
    %v942 = vpack.c.b16 %v850, %v846
    %v943 = vpack.c.b16 %v855, %v851
    %v944 = vpack.c.b16 %v856, %v852
    %v945 = vpack.c.b16 %v857, %v853
    %v946 = vpack.c.b16 %v858, %v854
    %v947 = vpack.c.b16 %v863, %v859
    %v948 = vpack.c.b16 %v864, %v860
    %v949 = vpack.c.b16 %v865, %v861
    %v950 = vpack.c.b16 %v866, %v862
    %v951 = vpack.c.b16 %v871, %v867
    %v952 = vpack.c.b16 %v872, %v868
    %v953 = vpack.c.b16 %v873, %v869
    %v954 = vpack.c.b16 %v874, %v870
    %v955 = vpack.c.b16 %v879, %v875
    %v956 = vpack.c.b16 %v880, %v876
    %v957 = vpack.c.b16 %v881, %v877
    %v958 = vpack.c.b16 %v882, %v878
    %v959 = vpack.c.b16 %v887, %v883
    %v960 = vpack.c.b16 %v888, %v884
    %v961 = vpack.c.b16 %v889, %v885
    %v962 = vpack.c.b16 %v890, %v886
    %v963 = vpack.c.b16 %v895, %v891
    %v964 = vpack.c.b16 %v896, %v892
    %v965 = vpack.c.b16 %v897, %v893
    %v966 = vpack.c.b16 %v898, %v894
    %v967 = vpack.c.b16 %v903, %v899
    %v968 = vpack.c.b16 %v904, %v900
    %v969 = vpack.c.b16 %v905, %v901
    %v970 = vpack.c.b16 %v906, %v902
    %1035 = vmatprep.subr.bf16.mxu0 %v908
    %1036 = vmatpush1.bf16.msra.mxu0 %v907
    %1037 = vmatprep.subr.bf16.mxu0 %v912
    %1038 = vmatpush1.bf16.msra.mxu0 %v911
    %1039 = vmatprep.subr.bf16.mxu0 %v916
    %1040 = vmatpush1.bf16.msra.mxu0 %v915
    %1041 = vmatprep.subr.bf16.mxu0 %v920
    %1042 = vmatpush1.bf16.msra.mxu0 %v919
    %1043 = vmatprep.subr.bf16.mxu0 %v924
    %1044 = vmatpush1.bf16.msra.mxu0 %v923
    %1045 = vmatprep.subr.bf16.mxu0 %v928
    %1046 = vmatpush1.bf16.msra.mxu0 %v927
    %1047 = vmatprep.subr.bf16.mxu0 %v932
    %1048 = vmatpush1.bf16.msra.mxu0 %v931
    %1049 = vmatprep.subr.bf16.mxu0 %v936
    %1050 = vmatpush1.bf16.msra.mxu0 %v935
    %1051 = vmatprep.subr.bf16.mxu0 %v940
    %1052 = vmatpush1.bf16.msra.mxu0 %v939
    %1053 = vmatprep.subr.bf16.mxu0 %v944
    %1054 = vmatpush1.bf16.msra.mxu0 %v943
    %1055 = vmatprep.subr.bf16.mxu0 %v948
    %1056 = vmatpush1.bf16.msra.mxu0 %v947
    %1057 = vmatprep.subr.bf16.mxu0 %v952
    %1058 = vmatpush1.bf16.msra.mxu0 %v951
    %1059 = vmatprep.subr.bf16.mxu0 %v956
    %1060 = vmatpush1.bf16.msra.mxu0 %v955
    %1061 = vmatprep.subr.bf16.mxu0 %v960
    %1062 = vmatpush1.bf16.msra.mxu0 %v959
    %1063 = vmatprep.subr.bf16.mxu0 %v964
    %1064 = vmatpush1.bf16.msra.mxu0 %v963
    %1065 = vmatprep.subr.bf16.mxu0 %v968
    %1066 = vmatpush1.bf16.msra.mxu0 %v967
    %1067 = vmatprep.mubr.bf16.mxu0 %v628
    %1068 = vmatmul.mubr.bf16.gmra.mrb[0].mxu0 %v627
    %v1069 = vpop.f32.mrb[0].mxu0
    %v1070 = vadd.f32 %v698, %v1069
    %v1071 = vpop.f32.mrb[0].mxu0
    %v1072 = vadd.f32 %v702, %v1071
    %v1073 = vpop.f32.mrb[0].mxu0
    %v1074 = vadd.f32 %v698, %v1073
    %v1075 = vpop.f32.mrb[0].mxu0
    %v1076 = vadd.f32 %v702, %v1075
    %1077 = vdwg.mxu0
    %1078 = vmatprep.subr.bf16.mxu0 %v910
    %1079 = vmatpush1.bf16.msra.mxu0 %v909
    %1080 = vmatprep.subr.bf16.mxu0 %v914
    %1081 = vmatpush1.bf16.msra.mxu0 %v913
    %1082 = vmatprep.subr.bf16.mxu0 %v918
    %1083 = vmatpush1.bf16.msra.mxu0 %v917
    %1084 = vmatprep.subr.bf16.mxu0 %v922
    %1085 = vmatpush1.bf16.msra.mxu0 %v921
    %1086 = vmatprep.subr.bf16.mxu0 %v926
    %1087 = vmatpush1.bf16.msra.mxu0 %v925
    %1088 = vmatprep.subr.bf16.mxu0 %v930
    %1089 = vmatpush1.bf16.msra.mxu0 %v929
    %1090 = vmatprep.subr.bf16.mxu0 %v934
    %1091 = vmatpush1.bf16.msra.mxu0 %v933
    %1092 = vmatprep.subr.bf16.mxu0 %v938
    %1093 = vmatpush1.bf16.msra.mxu0 %v937
    %1094 = vmatprep.subr.bf16.mxu0 %v942
    %1095 = vmatpush1.bf16.msra.mxu0 %v941
    %1096 = vmatprep.subr.bf16.mxu0 %v946
    %1097 = vmatpush1.bf16.msra.mxu0 %v945
    %1098 = vmatprep.subr.bf16.mxu0 %v950
    %1099 = vmatpush1.bf16.msra.mxu0 %v949
    %1100 = vmatprep.subr.bf16.mxu0 %v954
    %1101 = vmatpush1.bf16.msra.mxu0 %v953
    %1102 = vmatprep.subr.bf16.mxu0 %v958
    %1103 = vmatpush1.bf16.msra.mxu0 %v957
    %1104 = vmatprep.subr.bf16.mxu0 %v962
    %1105 = vmatpush1.bf16.msra.mxu0 %v961
    %1106 = vmatprep.subr.bf16.mxu0 %v966
    %1107 = vmatpush1.bf16.msra.mxu0 %v965
    %1108 = vmatprep.subr.bf16.mxu0 %v970
    %1109 = vmatpush1.bf16.msra.mxu0 %v969
    %1110 = vmatprep.mubr.bf16.mxu0 %v628
    %1111 = vmatmul.mubr.bf16.gmra.mrb[0].mxu0 %v627
    %v1112 = vpop.f32.mrb[0].mxu0
    %v1113 = vadd.f32 %v706, %v1112
    %v1114 = vpop.f32.mrb[0].mxu0
    %v1115 = vadd.f32 %v710, %v1114
    %v1116 = vpop.f32.mrb[0].mxu0
    %v1117 = vadd.f32 %v706, %v1116
    %v1118 = vpop.f32.mrb[0].mxu0
    %v1119 = vadd.f32 %v710, %v1118
    %1120 = vdwg.mxu0
    %v1121 = vmax.f32 %v1070, 0.0
    %v1122 = vmax.f32 %v1072, 0.0
    %v1123 = vmax.f32 %v1113, 0.0
    %v1124 = vmax.f32 %v1115, 0.0
    %v1125 = vmax.f32 %v1074, 0.0
    %v1126 = vmax.f32 %v1076, 0.0
    %v1127 = vmax.f32 %v1117, 0.0
    %v1128 = vmax.f32 %v1119, 0.0
    %v1129 = vpack.c.bf16 %v1125, %v1121
    %v1130 = vpack.c.bf16 %v1126, %v1122
    %v1131 = vpack.c.bf16 %v1127, %v1123
    %v1132 = vpack.c.bf16 %v1128, %v1124
    %v1133 = vld [vmem:[#allocation10] sm:$0xf]
    %v1134 = vld [vmem:[#allocation10 + $0x4] sm:$0xf]
    %v1135 = vld [vmem:[#allocation10 + $0x8] sm:$0xf]
    %v1136 = vld [vmem:[#allocation10 + $0xc] sm:$0xf]
    %v1137 = vld [vmem:[#allocation10 + $0x10] sm:$0xf]
    %v1138 = vld [vmem:[#allocation10 + $0x14] sm:$0xf]
    %v1139 = vld [vmem:[#allocation10 + $0x18] sm:$0xf]
    %v1140 = vld [vmem:[#allocation10 + $0x1c] sm:$0xf]
    %v1141 = vld [vmem:[#allocation10 + $0x20] sm:$0xf]
    %v1142 = vld [vmem:[#allocation10 + $0x24] sm:$0xf]
    %v1143 = vld [vmem:[#allocation10 + $0x28] sm:$0xf]
    %v1144 = vld [vmem:[#allocation10 + $0x2c] sm:$0xf]
    %v1145 = vld [vmem:[#allocation10 + $0x30] sm:$0xf]
    %v1146 = vld [vmem:[#allocation10 + $0x34] sm:$0xf]
    %v1147 = vld [vmem:[#allocation10 + $0x38] sm:$0xf]
    %v1148 = vld [vmem:[#allocation10 + $0x3c] sm:$0xf]
    %v1149 = vld [vmem:[#allocation10 + $0x40] sm:$0xf]
    %v1150 = vld [vmem:[#allocation10 + $0x44] sm:$0xf]
    %v1151 = vld [vmem:[#allocation10 + $0x48] sm:$0xf]
    %v1152 = vld [vmem:[#allocation10 + $0x4c] sm:$0xf]
    %v1153 = vld [vmem:[#allocation10 + $0x50] sm:$0xf]
    %v1154 = vld [vmem:[#allocation10 + $0x54] sm:$0xf]
    %v1155 = vld [vmem:[#allocation10 + $0x58] sm:$0xf]
    %v1156 = vld [vmem:[#allocation10 + $0x5c] sm:$0xf]
    %v1157 = vld [vmem:[#allocation10 + $0x60] sm:$0xf]
    %v1158 = vld [vmem:[#allocation10 + $0x64] sm:$0xf]
    %v1159 = vld [vmem:[#allocation10 + $0x68] sm:$0xf]
    %v1160 = vld [vmem:[#allocation10 + $0x6c] sm:$0xf]
    %v1161 = vld [vmem:[#allocation10 + $0x70] sm:$0xf]
    %v1162 = vld [vmem:[#allocation10 + $0x74] sm:$0xf]
    %v1163 = vld [vmem:[#allocation10 + $0x78] sm:$0xf]
    %v1164 = vld [vmem:[#allocation10 + $0x7c] sm:$0xf]
    %v1165 = vld [vmem:[#allocation10 + $0x80] sm:$0xf]
    %v1166 = vld [vmem:[#allocation10 + $0x84] sm:$0xf]
    %v1167 = vld [vmem:[#allocation10 + $0x88] sm:$0xf]
    %v1168 = vld [vmem:[#allocation10 + $0x8c] sm:$0xf]
    %v1169 = vld [vmem:[#allocation10 + $0x90] sm:$0xf]
    %v1170 = vld [vmem:[#allocation10 + $0x94] sm:$0xf]
    %v1171 = vld [vmem:[#allocation10 + $0x98] sm:$0xf]
    %v1172 = vld [vmem:[#allocation10 + $0x9c] sm:$0xf]
    %v1173 = vld [vmem:[#allocation10 + $0xa0] sm:$0xf]
    %v1174 = vld [vmem:[#allocation10 + $0xa4] sm:$0xf]
    %v1175 = vld [vmem:[#allocation10 + $0xa8] sm:$0xf]
    %v1176 = vld [vmem:[#allocation10 + $0xac] sm:$0xf]
    %v1177 = vld [vmem:[#allocation10 + $0xb0] sm:$0xf]
    %v1178 = vld [vmem:[#allocation10 + $0xb4] sm:$0xf]
    %v1179 = vld [vmem:[#allocation10 + $0xb8] sm:$0xf]
    %v1180 = vld [vmem:[#allocation10 + $0xbc] sm:$0xf]
    %v1181 = vld [vmem:[#allocation10 + $0xc0] sm:$0xf]
    %v1182 = vld [vmem:[#allocation10 + $0xc4] sm:$0xf]
    %v1183 = vld [vmem:[#allocation10 + $0xc8] sm:$0xf]
    %v1184 = vld [vmem:[#allocation10 + $0xcc] sm:$0xf]
    %v1185 = vld [vmem:[#allocation10 + $0xd0] sm:$0xf]
    %v1186 = vld [vmem:[#allocation10 + $0xd4] sm:$0xf]
    %v1187 = vld [vmem:[#allocation10 + $0xd8] sm:$0xf]
    %v1188 = vld [vmem:[#allocation10 + $0xdc] sm:$0xf]
    %v1189 = vld [vmem:[#allocation10 + $0xe0] sm:$0xf]
    %v1190 = vld [vmem:[#allocation10 + $0xe4] sm:$0xf]
    %v1191 = vld [vmem:[#allocation10 + $0xe8] sm:$0xf]
    %v1192 = vld [vmem:[#allocation10 + $0xec] sm:$0xf]
    %v1193 = vld [vmem:[#allocation10 + $0xf0] sm:$0xf]
    %v1194 = vld [vmem:[#allocation10 + $0xf4] sm:$0xf]
    %v1195 = vld [vmem:[#allocation10 + $0xf8] sm:$0xf]
    %v1196 = vld [vmem:[#allocation10 + $0xfc] sm:$0xf]
    %v1261 = vunpack.c.l.b16 %v1133
    %v1262 = vunpack.c.l.b16 %v1134
    %v1263 = vunpack.c.l.b16 %v1135
    %v1264 = vunpack.c.l.b16 %v1136
    %v1265 = vunpack.c.l.b16 %v1137
    %v1266 = vunpack.c.l.b16 %v1138
    %v1267 = vunpack.c.l.b16 %v1139
    %v1268 = vunpack.c.l.b16 %v1140
    %v1269 = vunpack.c.l.b16 %v1141
    %v1270 = vunpack.c.l.b16 %v1142
    %v1271 = vunpack.c.l.b16 %v1143
    %v1272 = vunpack.c.l.b16 %v1144
    %v1273 = vunpack.c.l.b16 %v1145
    %v1274 = vunpack.c.l.b16 %v1146
    %v1275 = vunpack.c.l.b16 %v1147
    %v1276 = vunpack.c.l.b16 %v1148
    %v1277 = vunpack.c.l.b16 %v1149
    %v1278 = vunpack.c.l.b16 %v1150
    %v1279 = vunpack.c.l.b16 %v1151
    %v1280 = vunpack.c.l.b16 %v1152
    %v1281 = vunpack.c.l.b16 %v1153
    %v1282 = vunpack.c.l.b16 %v1154
    %v1283 = vunpack.c.l.b16 %v1155
    %v1284 = vunpack.c.l.b16 %v1156
    %v1285 = vunpack.c.l.b16 %v1157
    %v1286 = vunpack.c.l.b16 %v1158
    %v1287 = vunpack.c.l.b16 %v1159
    %v1288 = vunpack.c.l.b16 %v1160
    %v1289 = vunpack.c.l.b16 %v1161
    %v1290 = vunpack.c.l.b16 %v1162
    %v1291 = vunpack.c.l.b16 %v1163
    %v1292 = vunpack.c.l.b16 %v1164
    %v1293 = vunpack.c.l.b16 %v1165
    %v1294 = vunpack.c.l.b16 %v1166
    %v1295 = vunpack.c.l.b16 %v1167
    %v1296 = vunpack.c.l.b16 %v1168
    %v1297 = vunpack.c.l.b16 %v1169
    %v1298 = vunpack.c.l.b16 %v1170
    %v1299 = vunpack.c.l.b16 %v1171
    %v1300 = vunpack.c.l.b16 %v1172
    %v1301 = vunpack.c.l.b16 %v1173
    %v1302 = vunpack.c.l.b16 %v1174
    %v1303 = vunpack.c.l.b16 %v1175
    %v1304 = vunpack.c.l.b16 %v1176
    %v1305 = vunpack.c.l.b16 %v1177
    %v1306 = vunpack.c.l.b16 %v1178
    %v1307 = vunpack.c.l.b16 %v1179
    %v1308 = vunpack.c.l.b16 %v1180
    %v1309 = vunpack.c.l.b16 %v1181
    %v1310 = vunpack.c.l.b16 %v1182
    %v1311 = vunpack.c.l.b16 %v1183
    %v1312 = vunpack.c.l.b16 %v1184
    %v1313 = vunpack.c.l.b16 %v1185
    %v1314 = vunpack.c.l.b16 %v1186
    %v1315 = vunpack.c.l.b16 %v1187
    %v1316 = vunpack.c.l.b16 %v1188
    %v1317 = vunpack.c.l.b16 %v1189
    %v1318 = vunpack.c.l.b16 %v1190
    %v1319 = vunpack.c.l.b16 %v1191
    %v1320 = vunpack.c.l.b16 %v1192
    %v1321 = vunpack.c.l.b16 %v1193
    %v1322 = vunpack.c.l.b16 %v1194
    %v1323 = vunpack.c.l.b16 %v1195
    %v1324 = vunpack.c.l.b16 %v1196
    %v1325 = vpack.c.b16 %v1262, %v1261
    %v1326 = vpack.c.b16 %v1264, %v1263
    %v1327 = vpack.c.b16 %v1266, %v1265
    %v1328 = vpack.c.b16 %v1268, %v1267
    %v1329 = vpack.c.b16 %v1270, %v1269
    %v1330 = vpack.c.b16 %v1272, %v1271
    %v1331 = vpack.c.b16 %v1274, %v1273
    %v1332 = vpack.c.b16 %v1276, %v1275
    %v1333 = vpack.c.b16 %v1278, %v1277
    %v1334 = vpack.c.b16 %v1280, %v1279
    %v1335 = vpack.c.b16 %v1282, %v1281
    %v1336 = vpack.c.b16 %v1284, %v1283
    %v1337 = vpack.c.b16 %v1286, %v1285
    %v1338 = vpack.c.b16 %v1288, %v1287
    %v1339 = vpack.c.b16 %v1290, %v1289
    %v1340 = vpack.c.b16 %v1292, %v1291
    %v1341 = vpack.c.b16 %v1294, %v1293
    %v1342 = vpack.c.b16 %v1296, %v1295
    %v1343 = vpack.c.b16 %v1298, %v1297
    %v1344 = vpack.c.b16 %v1300, %v1299
    %v1345 = vpack.c.b16 %v1302, %v1301
    %v1346 = vpack.c.b16 %v1304, %v1303
    %v1347 = vpack.c.b16 %v1306, %v1305
    %v1348 = vpack.c.b16 %v1308, %v1307
    %v1349 = vpack.c.b16 %v1310, %v1309
    %v1350 = vpack.c.b16 %v1312, %v1311
    %v1351 = vpack.c.b16 %v1314, %v1313
    %v1352 = vpack.c.b16 %v1316, %v1315
    %v1353 = vpack.c.b16 %v1318, %v1317
    %v1354 = vpack.c.b16 %v1320, %v1319
    %v1355 = vpack.c.b16 %v1322, %v1321
    %v1356 = vpack.c.b16 %v1324, %v1323
    %1389 = vmatprep.subr.bf16.mxu0 0
    %1390 = vmatpush1.bf16.msra.mxu0 %v1325
    %1391 = vmatprep.subr.bf16.mxu0 0
    %1392 = vmatpush1.bf16.msra.mxu0 %v1326
    %1393 = vmatprep.subr.bf16.mxu0 0
    %1394 = vmatpush1.bf16.msra.mxu0 %v1327
    %1395 = vmatprep.subr.bf16.mxu0 0
    %1396 = vmatpush1.bf16.msra.mxu0 %v1328
    %1397 = vmatprep.subr.bf16.mxu0 0
    %1398 = vmatpush1.bf16.msra.mxu0 %v1329
    %1399 = vmatprep.subr.bf16.mxu0 0
    %1400 = vmatpush1.bf16.msra.mxu0 %v1330
    %1401 = vmatprep.subr.bf16.mxu0 0
    %1402 = vmatpush1.bf16.msra.mxu0 %v1331
    %1403 = vmatprep.subr.bf16.mxu0 0
    %1404 = vmatpush1.bf16.msra.mxu0 %v1332
    %1405 = vmatprep.subr.bf16.mxu0 0
    %1406 = vmatpush1.bf16.msra.mxu0 %v1333
    %1407 = vmatprep.subr.bf16.mxu0 0
    %1408 = vmatpush1.bf16.msra.mxu0 %v1334
    %1409 = vmatprep.subr.bf16.mxu0 0
    %1410 = vmatpush1.bf16.msra.mxu0 %v1335
    %1411 = vmatprep.subr.bf16.mxu0 0
    %1412 = vmatpush1.bf16.msra.mxu0 %v1336
    %1413 = vmatprep.subr.bf16.mxu0 0
    %1414 = vmatpush1.bf16.msra.mxu0 %v1337
    %1415 = vmatprep.subr.bf16.mxu0 0
    %1416 = vmatpush1.bf16.msra.mxu0 %v1338
    %1417 = vmatprep.subr.bf16.mxu0 0
    %1418 = vmatpush1.bf16.msra.mxu0 %v1339
    %1419 = vmatprep.subr.bf16.mxu0 0
    %1420 = vmatpush1.bf16.msra.mxu0 %v1340
    %1421 = vmatprep.mubr.bf16.mxu0 %v1130
    %1422 = vmatmul.mubr.bf16.gmra.mrb[0].mxu0 %v1129
    %v1423 = vpop.f32.mrb[0].mxu0
    %v1424 = vadd.f32 %v348, %v1423
    %v1425 = vpop.f32.mrb[0].mxu0
    %v1426 = vpop.f32.mrb[0].mxu0
    %v1427 = vadd.f32 %v351, %v1426
    %v1428 = vpop.f32.mrb[0].mxu0
    %1429 = vdwg.mxu0
    %1430 = vmatprep.subr.bf16.mxu0 0
    %1431 = vmatpush1.bf16.msra.mxu0 %v1341
    %1432 = vmatprep.subr.bf16.mxu0 0
    %1433 = vmatpush1.bf16.msra.mxu0 %v1342
    %1434 = vmatprep.subr.bf16.mxu0 0
    %1435 = vmatpush1.bf16.msra.mxu0 %v1343
    %1436 = vmatprep.subr.bf16.mxu0 0
    %1437 = vmatpush1.bf16.msra.mxu0 %v1344
    %1438 = vmatprep.subr.bf16.mxu0 0
    %1439 = vmatpush1.bf16.msra.mxu0 %v1345
    %1440 = vmatprep.subr.bf16.mxu0 0
    %1441 = vmatpush1.bf16.msra.mxu0 %v1346
    %1442 = vmatprep.subr.bf16.mxu0 0
    %1443 = vmatpush1.bf16.msra.mxu0 %v1347
    %1444 = vmatprep.subr.bf16.mxu0 0
    %1445 = vmatpush1.bf16.msra.mxu0 %v1348
    %1446 = vmatprep.subr.bf16.mxu0 0
    %1447 = vmatpush1.bf16.msra.mxu0 %v1349
    %1448 = vmatprep.subr.bf16.mxu0 0
    %1449 = vmatpush1.bf16.msra.mxu0 %v1350
    %1450 = vmatprep.subr.bf16.mxu0 0
    %1451 = vmatpush1.bf16.msra.mxu0 %v1351
    %1452 = vmatprep.subr.bf16.mxu0 0
    %1453 = vmatpush1.bf16.msra.mxu0 %v1352
    %1454 = vmatprep.subr.bf16.mxu0 0
    %1455 = vmatpush1.bf16.msra.mxu0 %v1353
    %1456 = vmatprep.subr.bf16.mxu0 0
    %1457 = vmatpush1.bf16.msra.mxu0 %v1354
    %1458 = vmatprep.subr.bf16.mxu0 0
    %1459 = vmatpush1.bf16.msra.mxu0 %v1355
    %1460 = vmatprep.subr.bf16.mxu0 0
    %1461 = vmatpush1.bf16.msra.mxu0 %v1356
    %1462 = vmatprep.mubr.bf16.mxu0 %v1132
    %1463 = vmatmul.mubr.bf16.gmra.mrb[0].mxu0 %v1131
    %v1464 = vpop.f32.mrb[0].mxu0
    %v1465 = vadd.f32 %v1424, %v1464
    %v1466 = vpop.f32.mrb[0].mxu0
    %v1467 = vpop.f32.mrb[0].mxu0
    %v1468 = vadd.f32 %v1427, %v1467
    %v1469 = vpop.f32.mrb[0].mxu0
    %1470 = vdwg.mxu0
    %v1471 = vld [vmem:[%s8] sm:$0x1]
    %v1473 = vlaneseq
    %v1474 = vshrl.u32 %v1473, 7
    %v1475 = vsub.s32 0, %v1474
    %v1476 = vrot.slane %v1471, %v1475
    %v1478 = vadd.f32 %v1465, %v1476
    %v1479 = vadd.f32 %v1468, %v1476
    %v1480 = vlaneseq
    %v1481 = vand.u32 %v1480, 127
    %vm1482 = vcmp.lt.s32.totalorder %v1481, 8
    %v1483 = vsel %vm1482, %v1478, -1e+30
    %v1484 = vsel %vm1482, %v1479, -1e+30
    %1485 = vmax.xlane.f32.xlu0 %v1483
    %v1486 = vpop.xlane.xlu0 %1485
    %1487 = vmax.xlane.f32.xlu0 %v1484
    %v1488 = vpop.xlane.xlu0 %1487
    %v1489 = vsub.f32 %v1483, %v1486
    %v1490 = vsub.f32 %v1484, %v1488
    %v1491 = vmul.f32 %v1489, 1.442695
    %v1492 = vpow.pop %v1491
    %v1493 = vmul.f32 %v1490, 1.442695
    %v1494 = vpow.pop %v1493
    %1495 = vadd.xlane.f32.xlu0 %v1492
    %v1496 = vpop.xlane.xlu0 %1495
    %1497 = vadd.xlane.f32.xlu0 %v1494
    %v1498 = vpop.xlane.xlu0 %1497
    %v1499 = vrcp.pop %v1496
    %v1500 = vrcp.pop %v1498
    %v1501 = vmul.f32 %v1492, %v1499
    %v1502 = vmul.f32 %v1494, %v1500
    %vm1503 = vcmp.eq.s32.totalorder %v1481, 8
    %v1504 = vsel %vm1503, %v1478, 0.0
    %v1505 = vsel %vm1503, %v1479, 0.0
    %v1506 = vsel %vm1482, %v1501, %v1504
    %v1507 = vsel %vm1482, %v1502, %v1505
    %v1508 = vpack.c.bf16 %v1507, %v1506
    %v1510 = vunpack.c.l.b16 %v1508
    %v1511 = vunpack.c.h.b16 %v1508
    %v1512 = vpack.c.b16 %v1510, %v1510
    %v1513 = vpack.c.b16 %v1511, %v1511
    %1516 = vst [vmem:[#allocation11] sm:$0xf] %v1512
    %1517 = vst [vmem:[#allocation11 + $0x4] sm:$0xf] %v1513
    // Predicated region
    $region58: #{tpu_custom_call.1} parent=1 // pred_check
      _
    $region59: #{tpu_custom_call.1} parent=1 // pred_check_branch
      %1519 = sbr.rel (0) target = $region61
    $region60: #{tpu_custom_call.1} parent=1 // pred_region
      %s1521 = ssub.s32 128, 128
      %1522 = vsyncadd [#allocation4], %s1521
      %s1523 = sshll.u32 [#allocation11], 4
      %s1524 = int_to_ptr.vmem [resolvable:$true] %s1523
      %1529 = dma.vmem_to_hbm [thread:$0]  %s1524, 128, %s9, [#allocation4], 64, 64, 4
    $region61: #{tpu_custom_call.1} parent=1 // pred_fallthru
      _
    // Predicated region
    $region62: #{tpu_custom_call.1} parent=1 // pred_check
      _
    $region63: #{tpu_custom_call.1} parent=1 // pred_check_branch
      %1531 = sbr.rel (0) target = $region65
    $region64: #{tpu_custom_call.1} parent=1 // pred_region
      %1532 = dma.done [#allocation4], 128
    $region65: #{tpu_custom_call.1} parent=1 // pred_fallthru
      _
    %1533 = vsyncpa [#allocation3], 1
    %1534 = vsyncpa [#allocation6], 1
    %1535 = vsyncpa [#allocation9], 1
    %1536 = vsyncpa [#allocation4], 1

</llo_original>
